<compile_context>
chip_gen: v7x
topology: tpu7x:2x2x1
jax: 0.10.0
libtpu: 0.0.40
codegen_flags: <defaults>
</compile_context>

<pallas_src>
import functools

import jax
import jax.numpy as jnp
from jax.experimental import pallas as pl
from jax.experimental.pallas import tpu as pltpu

BN_EPS = 1e-5


def _round_up(x, m):
    return ((x + m - 1) // m) * m


def speaker_encoder_kernel(
    f_ref,        # (Bb, Tp, Hp)  features block, bf16
    w1_ref,       # (Hp, Hp)      attention_pool[0] weight, bf16
    w3_ref,       # (Hp, Hp)      projection[0] weight with BN folded in, bf16
    w4_ref,       # (Hp, Ep)      projection[3] weight (zero-padded), bf16
    vecs_ref,     # (4, Hp) f32: [b1 ; w2 as row ; folded b3 ; PReLU alpha bcast]
    b4_ref,       # (1, Ep)       projection[3] bias (zero-padded), f32
    out_ref,      # (Bb, Ep)      f32
    *,
    t_valid,      # static: number of real (unpadded) time steps
):
    f32, bf16 = jnp.float32, jnp.bfloat16
    Bb, T, H = f_ref.shape

    f = f_ref[...]                                   # (Bb, T, H) bf16

    b1 = vecs_ref[0:1, :]                            # (1, H) f32
    w2_row = vecs_ref[1:2, :].astype(bf16)           # (1, H) bf16
    b3f = vecs_ref[2:3, :]                           # (1, H) f32 (BN-folded)
    alpha = vecs_ref[3:4, 0:1]                       # (1, 1) f32 PReLU slope

    # --- attention pooling ---------------------------------------------------
    # One flat (Bb*T, H) @ (H, H) GEMM keeps the MXU rows full; the reshape is
    # a free relabel because T is a multiple of 8 and H a multiple of 128.
    pre = jnp.dot(f.reshape(Bb * T, H), w1_ref[...],
                  preferred_element_type=f32) + b1   # (Bb*T, H) f32
    h = jnp.tanh(pre).astype(bf16).reshape(Bb, T, H)  # bf16 halves vreg traffic

    # Linear(H, 1) as a bf16 VPU multiply + f32 lane reduce (an N=1 MXU matmul
    # would waste the systolic array).  Its bias is constant over T so it
    # cancels in Softmax(dim=1) and is dropped.
    s = jnp.sum(h * w2_row, axis=-1, dtype=f32)      # (Bb, T) f32

    # Mask zero-padded time rows out of the softmax.
    if t_valid < T:
        t_idx = jax.lax.broadcasted_iota(jnp.int32, (Bb, T), 1)
        s = jnp.where(t_idx < t_valid, s, -1e30)

    # Softmax over time (dim=1), max-subtracted; EUP reciprocal for the norm.
    s = s - jnp.max(s, axis=-1, keepdims=True)
    e = jnp.exp(s)
    attn = e * pl.reciprocal(jnp.sum(e, axis=-1, keepdims=True), approx=True)

    # Weighted sum over time: bf16 products, f32 accumulation (no f32 copy of
    # the features tile).
    emb = jnp.sum(attn[:, :, None].astype(bf16) * f, axis=1, dtype=f32)  # (Bb, H)

    # --- projection head -----------------------------------------------------
    # Linear(H, H) with BatchNorm1d (eval) folded in, then PReLU.
    p = jnp.dot(emb.astype(bf16), w3_ref[...],
                preferred_element_type=f32) + b3f    # (Bb, H) f32
    act = jnp.where(p >= 0, p, alpha * p)

    # Final Linear(H, E_pad); padded columns are zero and sliced off outside.
    out = jnp.dot(act.astype(bf16), w4_ref[...],
                  preferred_element_type=f32) + b4_ref[...]
    out_ref[...] = out.astype(out_ref.dtype)


def _vmem_capacity_bytes():
    """Physical VMEM per core, with a conservative fallback (64 MiB = v7x)."""
    try:
        return int(pltpu.get_tpu_info().vmem_capacity_bytes)
    except Exception:
        try:
            kind = jax.devices()[0].device_kind.lower()
        except Exception:
            kind = ""
        return (64 if "v7" in kind else 128) * 2**20


def speaker_encoder(features, params, *, block_b=None):
    f32, bf16 = jnp.float32, jnp.bfloat16
    B, T, H = features.shape
    E = params["w4"].shape[1]

    # ---- lane/sublane-aligned dims (H, E -> lanes; T -> sublanes) -----------
    Hp = _round_up(H, 128)
    Ep = _round_up(E, 128)
    Tp = _round_up(T, 8)

    # ---- one-time static weight prep (outside the kernel) -------------------
    # Fold BatchNorm1d (eval mode, running stats) into the projection Linear,
    # then zero-pad everything to the lane-aligned sizes.
    scale = params["bn_g"] / jnp.sqrt(params["bn_v"] + BN_EPS)      # (1, H)
    shift = params["bn_b"] - params["bn_m"] * scale                 # (1, H)
    w3f = params["w3"] * scale                                      # (H, H)
    b3f = params["b3"] * scale + shift                              # (1, H)

    def padw(w, rows, cols):
        return jnp.pad(w, ((0, rows - w.shape[0]), (0, cols - w.shape[1])))

    w1p = padw(params["w1"], Hp, Hp).astype(bf16)
    w3p = padw(w3f, Hp, Hp).astype(bf16)
    w4p = padw(params["w4"], Hp, Ep).astype(bf16)
    b4p = padw(params["b4"], 1, Ep).astype(f32)

    # Pack the small per-feature vectors into a single VMEM block.
    vecs = jnp.concatenate(
        [padw(params["b1"], 1, Hp),                    # attention_pool[0] bias
         padw(params["w2"].T, 1, Hp),                  # Linear(H,1) weight as row
         padw(b3f, 1, Hp),                             # BN-folded projection bias
         jnp.broadcast_to(params["alpha"], (1, Hp))],  # scalar PReLU alpha
        axis=0).astype(f32)                            # (4, Hp)

    # ---- generation-aware VMEM budgeting & batch blocking --------------------
    vmem_cap = _vmem_capacity_bytes()
    # ~96 MiB on v5e/v6e (128 MiB physical), ~48 MiB on v7x (64 MiB physical).
    vmem_limit = int(min(vmem_cap * 3 // 4, 100 * 2**20))

    # Per-batch-row live bytes: double-buffered bf16 features tile (2*2B) +
    # f32 pre-activation (4B) + bf16 tanh output (2B).  Weights charged at 2x
    # in case single-buffering is unavailable.
    weight_bytes = 2 * (w1p.size * 2 + w3p.size * 2 + w4p.size * 2
                        + vecs.size * 4 + b4p.size * 4)
    act_budget = max(vmem_limit - weight_bytes - (4 << 20), 2 << 20)
    row_bytes = Tp * Hp * (2 * 2 + 4 + 2)

    if block_b is None:
        Bb = int(act_budget // row_bytes)
        Bb = max(8, min(128, (Bb // 8) * 8))
    else:
        Bb = max(8, _round_up(int(block_b), 8))
    Bb = min(Bb, _round_up(B, 8))
    # Megacore (v7x has 2 TensorCores): keep the parallel batch grid >= 2 steps
    # when the batch is large enough to split.
    if B > 8 and _round_up(B, 8) // Bb < 2:
        Bb = max(8, _round_up(pl.cdiv(B, 2), 8))

    B_pad = _round_up(B, Bb)
    feats = features.astype(bf16)
    if (B_pad, Tp, Hp) != (B, T, H):
        feats = jnp.pad(feats, ((0, B_pad - B), (0, Tp - T), (0, Hp - H)))

    weight_args = (w1p, w3p, w4p, vecs, b4p)
    kernel = functools.partial(speaker_encoder_kernel, t_valid=T)

    def build(single_buffer_weights):
        if single_buffer_weights:
            # Grid-invariant weights: one VMEM buffer is enough; frees VMEM
            # for a larger features tile.
            wspecs = [pl.BlockSpec(a.shape, lambda b: (0, 0),
                                   pipeline_mode=pl.Buffered(1))
                      for a in weight_args]
        else:
            wspecs = [pl.BlockSpec(a.shape, lambda b: (0, 0))
                      for a in weight_args]
        return pl.pallas_call(
            kernel,
            out_shape=jax.ShapeDtypeStruct((B_pad, Ep), jnp.float32),
            grid_spec=pltpu.PrefetchScalarGridSpec(
                num_scalar_prefetch=0,
                grid=(B_pad // Bb,),
                in_specs=[pl.BlockSpec((Bb, Tp, Hp), lambda b: (b, 0, 0))]
                         + wspecs,
                out_specs=pl.BlockSpec((Bb, Ep), lambda b: (b, 0)),
            ),
            compiler_params=pltpu.CompilerParams(
                dimension_semantics=("parallel",),
                vmem_limit_bytes=vmem_limit,
            ),
        )

    try:
        out = build(True)(feats, *weight_args)
        jax.block_until_ready(out)
    except Exception:
        # Fallback if pipeline_mode / Buffered(1) is unsupported on this JAX.
        out = build(False)(feats, *weight_args)
    return out[:B, :E]


def reference(features, p):
    """Pure-JAX f32 reference mirroring the PyTorch module (eval mode)."""
    h = jnp.tanh(features @ p["w1"] + p["b1"][0])
    s = h @ p["w2"] + p["b2"][0]                     # (B, T, 1)
    w = jax.nn.softmax(s, axis=1)                    # Softmax(dim=1)
    emb = jnp.sum(w * features, axis=1)              # (B, H)
    x = emb @ p["w3"] + p["b3"][0]
    bn = (x - p["bn_m"][0]) / jnp.sqrt(p["bn_v"][0] + BN_EPS) * p["bn_g"][0] + p["bn_b"][0]
    act = jnp.where(bn >= 0, bn, p["alpha"][0, 0] * bn)
    return act @ p["w4"] + p["b4"][0]


def reference_matched(features, p):
    """Reference emulating the kernel's bf16/f32 precision choices + folded BN."""
    bf, f32 = jnp.bfloat16, jnp.float32
    B, T, H = features.shape
    f = features.astype(bf)
    scale = p["bn_g"] / jnp.sqrt(p["bn_v"] + BN_EPS)
    shift = p["bn_b"] - p["bn_m"] * scale
    w3f = (p["w3"] * scale).astype(bf)
    b3f = p["b3"] * scale + shift
    pre = jnp.dot(f.reshape(B * T, H), p["w1"].astype(bf),
                  preferred_element_type=f32) + p["b1"]
    h = jnp.tanh(pre).astype(bf).reshape(B, T, H)
    s = jnp.sum(h * p["w2"].T.astype(bf), axis=-1, dtype=f32)  # bias cancels
    attn = jax.nn.softmax(s, axis=-1)
    emb = jnp.sum(attn[:, :, None].astype(bf) * f, axis=1, dtype=f32)
    x = jnp.dot(emb.astype(bf), w3f, preferred_element_type=f32) + b3f
    act = jnp.where(x >= 0, x, p["alpha"] * x)
    return jnp.dot(act.astype(bf), p["w4"].astype(bf),
                   preferred_element_type=f32) + p["b4"]


def init_params(key, H, E):
    ks = jax.random.split(key, 8)

    def lin(k, fan_in, fan_out):
        kw, kb = jax.random.split(k)
        lim = 1.0 / jnp.sqrt(fan_in)
        w = jax.random.uniform(kw, (fan_in, fan_out), jnp.float32, -lim, lim)
        b = jax.random.uniform(kb, (1, fan_out), jnp.float32, -lim, lim)
        return w, b

    w1, b1 = lin(ks[0], H, H)    # attention_pool Linear(H, H)
    w2, b2 = lin(ks[1], H, 1)    # attention_pool Linear(H, 1)
    w3, b3 = lin(ks[2], H, H)    # projection Linear(H, H)
    w4, b4 = lin(ks[3], H, E)    # projection Linear(H, E)
    bn_g = jax.random.uniform(ks[4], (1, H), jnp.float32, 0.5, 1.5)
    bn_b = jax.random.uniform(ks[5], (1, H), jnp.float32, -0.1, 0.1)
    bn_m = jax.random.uniform(ks[6], (1, H), jnp.float32, -0.5, 0.5)
    bn_v = jax.random.uniform(ks[7], (1, H), jnp.float32, 0.5, 1.5)
    alpha = jnp.full((1, 1), 0.25, jnp.float32)   # PReLU default init
    return dict(w1=w1, b1=b1, w2=w2, b2=b2, w3=w3, b3=b3,
                bn_g=bn_g, bn_b=bn_b, bn_m=bn_m, bn_v=bn_v,
                alpha=alpha, w4=w4, b4=b4)


def _check(key, B, T, H, E):
    k_feat, k_par = jax.random.split(key)
    features = jax.random.normal(k_feat, (B, T, H), jnp.float32)
    params = init_params(k_par, H, E)

    out = speaker_encoder(features, params)
    jax.block_until_ready(out)
    assert out.shape == (B, E), out.shape

    # Tight check vs. a reference matching the kernel's precision choices.
    ref_m = reference_matched(features, params)
    assert jnp.allclose(out, ref_m, atol=1e-2, rtol=1e-2), \
        float(jnp.max(jnp.abs(out - ref_m)))

    # Sanity check vs. the faithful f32 PyTorch-semantics reference
    # (tolerance reflects bf16 MXU/VPU operands + approx softmax reciprocal).
    ref_f = reference(features, params)
    assert jnp.allclose(out, ref_f, atol=1e-1, rtol=5e-2), \
        float(jnp.max(jnp.abs(out - ref_f)))


if __name__ == "__main__":
    key = jax.random.PRNGKey(0)
    k1, k2 = jax.random.split(key)

    # Small aligned shapes: batch, time, hidden, embedding.
    _check(k1, B=2, T=8, H=32, E=16)
    # Unaligned shapes: exercises T/H/E/B padding, the softmax time mask,
    # and a multi-step (megacore-shardable) batch grid.
    _check(k2, B=10, T=13, H=40, E=24)

    print("KERNEL_OK")
</pallas_src>

<mosaic_0001>
module attributes {stable_mosaic.version = 11 : i64} {
  func.func @speaker_encoder_kernel(%arg0: i32, %arg1: memref<8x8x128xbf16, #tpu.memory_space<vmem>>, %arg2: memref<128x128xbf16, #tpu.memory_space<vmem>>, %arg3: memref<128x128xbf16, #tpu.memory_space<vmem>>, %arg4: memref<128x128xbf16, #tpu.memory_space<vmem>>, %arg5: memref<4x128xf32, #tpu.memory_space<vmem>>, %arg6: memref<1x128xf32, #tpu.memory_space<vmem>>, %arg7: memref<8x128xf32, #tpu.memory_space<vmem>>) attributes {dimension_semantics = [#tpu.dimension_semantics<parallel>], iteration_bounds = array<i64: 1>, scalar_prefetch = 0 : i64, scratch_operands = 0 : i64, tpu.core_type = #tpu.core_type<tc>, window_params = [{transform_indices = @transform_0, window_bounds = array<i64: 8, 8, 128>}, {pipeline_mode = #tpu.pipeline_mode<synchronous>, transform_indices = @transform_1, window_bounds = array<i64: 128, 128>}, {pipeline_mode = #tpu.pipeline_mode<synchronous>, transform_indices = @transform_2, window_bounds = array<i64: 128, 128>}, {pipeline_mode = #tpu.pipeline_mode<synchronous>, transform_indices = @transform_3, window_bounds = array<i64: 128, 128>}, {pipeline_mode = #tpu.pipeline_mode<synchronous>, transform_indices = @transform_4, window_bounds = array<i64: 4, 128>}, {pipeline_mode = #tpu.pipeline_mode<synchronous>, transform_indices = @transform_5, window_bounds = array<i64: 1, 128>}, {transform_indices = @transform_6, window_bounds = array<i64: 8, 128>}]} {
    %c0 = arith.constant 0 : index
    %c0_0 = arith.constant 0 : index
    %c0_1 = arith.constant 0 : index
    %0 = vector.load %arg1[%c0, %c0_0, %c0_1] : memref<8x8x128xbf16, #tpu.memory_space<vmem>>, vector<8x8x128xbf16>
    %c0_2 = arith.constant 0 : index
    %c0_3 = arith.constant 0 : index
    %1 = vector.load %arg5[%c0_2, %c0_3] : memref<4x128xf32, #tpu.memory_space<vmem>>, vector<1x128xf32>
    %c1 = arith.constant 1 : index
    %c0_4 = arith.constant 0 : index
    %2 = vector.load %arg5[%c1, %c0_4] : memref<4x128xf32, #tpu.memory_space<vmem>>, vector<1x128xf32>
    %3 = arith.truncf %2 : vector<1x128xf32> to vector<1x128xbf16>
    %c2 = arith.constant 2 : index
    %c0_5 = arith.constant 0 : index
    %4 = vector.load %arg5[%c2, %c0_5] : memref<4x128xf32, #tpu.memory_space<vmem>>, vector<1x128xf32>
    %c3 = arith.constant 3 : index
    %c0_6 = arith.constant 0 : index
    %5 = vector.load %arg5[%c3, %c0_6] : memref<4x128xf32, #tpu.memory_space<vmem>>, vector<1x1xf32>
    %6 = vector.shape_cast %0 : vector<8x8x128xbf16> to vector<64x128xbf16>
    %c0_7 = arith.constant 0 : index
    %c0_8 = arith.constant 0 : index
    %7 = vector.load %arg2[%c0_7, %c0_8] : memref<128x128xbf16, #tpu.memory_space<vmem>>, vector<128x128xbf16>
    %cst = arith.constant dense<0.000000e+00> : vector<64x128xf32>
    %8 = tpu.matmul %6, %7, %cst {dimension_numbers = #tpu.dot_dimension_numbers<[1], [0], [0], [1], [0, 0, 1, 1], [], []>} : vector<64x128xbf16>, vector<128x128xbf16>, vector<64x128xf32> -> vector<64x128xf32>
    %9 = vector.broadcast %1 : vector<1x128xf32> to vector<64x128xf32>
    %10 = arith.addf %8, %9 : vector<64x128xf32>
    %11 = math.tanh %10 : vector<64x128xf32>
    %12 = arith.truncf %11 : vector<64x128xf32> to vector<64x128xbf16>
    %13 = vector.shape_cast %12 : vector<64x128xbf16> to vector<8x8x128xbf16>
    %14 = vector.shape_cast %3 : vector<1x128xbf16> to vector<1x1x128xbf16>
    %15 = vector.broadcast %14 : vector<1x1x128xbf16> to vector<8x8x128xbf16>
    %16 = arith.mulf %13, %15 : vector<8x8x128xbf16>
    %17 = arith.extf %16 : vector<8x8x128xbf16> to vector<8x8x128xf32>
    %cst_9 = arith.constant dense<0.000000e+00> : vector<8x8xf32>
    %18 = vector.multi_reduction <add>, %17, %cst_9 [2] : vector<8x8x128xf32> to vector<8x8xf32>
    %cst_10 = arith.constant dense<0xFF800000> : vector<8xf32>
    %19 = vector.multi_reduction <maximumf>, %18, %cst_10 [1] : vector<8x8xf32> to vector<8xf32>
    %20 = vector.shape_cast %19 : vector<8xf32> to vector<8x1xf32>
    %21 = vector.broadcast %20 : vector<8x1xf32> to vector<8x8xf32>
    %22 = arith.subf %18, %21 : vector<8x8xf32>
    %23 = math.exp %22 : vector<8x8xf32>
    %cst_11 = arith.constant dense<0.000000e+00> : vector<8xf32>
    %24 = vector.multi_reduction <add>, %23, %cst_11 [1] : vector<8x8xf32> to vector<8xf32>
    %25 = vector.shape_cast %24 : vector<8xf32> to vector<8x1xf32>
    %26 = tpu.reciprocal %25 {approx = true} : vector<8x1xf32> -> vector<8x1xf32>
    %27 = vector.broadcast %26 : vector<8x1xf32> to vector<8x8xf32>
    %28 = arith.mulf %23, %27 : vector<8x8xf32>
    %29 = vector.shape_cast %28 : vector<8x8xf32> to vector<8x8x1xf32>
    %30 = arith.truncf %29 : vector<8x8x1xf32> to vector<8x8x1xbf16>
    %31 = vector.broadcast %30 : vector<8x8x1xbf16> to vector<8x8x128xbf16>
    %32 = arith.mulf %31, %0 : vector<8x8x128xbf16>
    %33 = arith.extf %32 : vector<8x8x128xbf16> to vector<8x8x128xf32>
    %cst_12 = arith.constant dense<0.000000e+00> : vector<8x128xf32>
    %34 = vector.multi_reduction <add>, %33, %cst_12 [1] : vector<8x8x128xf32> to vector<8x128xf32>
    %35 = arith.truncf %34 : vector<8x128xf32> to vector<8x128xbf16>
    %c0_13 = arith.constant 0 : index
    %c0_14 = arith.constant 0 : index
    %36 = vector.load %arg3[%c0_13, %c0_14] : memref<128x128xbf16, #tpu.memory_space<vmem>>, vector<128x128xbf16>
    %cst_15 = arith.constant dense<0.000000e+00> : vector<8x128xf32>
    %37 = tpu.matmul %35, %36, %cst_15 {dimension_numbers = #tpu.dot_dimension_numbers<[1], [0], [0], [1], [0, 0, 1, 1], [], []>} : vector<8x128xbf16>, vector<128x128xbf16>, vector<8x128xf32> -> vector<8x128xf32>
    %38 = vector.broadcast %4 : vector<1x128xf32> to vector<8x128xf32>
    %39 = arith.addf %37, %38 : vector<8x128xf32>
    %cst_16 = arith.constant 0.000000e+00 : f32
    %40 = vector.broadcast %cst_16 : f32 to vector<8x128xf32>
    %41 = arith.cmpf oge, %39, %40 : vector<8x128xf32>
    %42 = vector.broadcast %5 : vector<1x1xf32> to vector<8x128xf32>
    %43 = arith.mulf %42, %39 : vector<8x128xf32>
    %44 = arith.select %41, %39, %43 : vector<8x128xi1>, vector<8x128xf32>
    %45 = arith.truncf %44 : vector<8x128xf32> to vector<8x128xbf16>
    %c0_17 = arith.constant 0 : index
    %c0_18 = arith.constant 0 : index
    %46 = vector.load %arg4[%c0_17, %c0_18] : memref<128x128xbf16, #tpu.memory_space<vmem>>, vector<128x128xbf16>
    %cst_19 = arith.constant dense<0.000000e+00> : vector<8x128xf32>
    %47 = tpu.matmul %45, %46, %cst_19 {dimension_numbers = #tpu.dot_dimension_numbers<[1], [0], [0], [1], [0, 0, 1, 1], [], []>} : vector<8x128xbf16>, vector<128x128xbf16>, vector<8x128xf32> -> vector<8x128xf32>
    %c0_20 = arith.constant 0 : index
    %c0_21 = arith.constant 0 : index
    %48 = vector.load %arg6[%c0_20, %c0_21] : memref<1x128xf32, #tpu.memory_space<vmem>>, vector<1x128xf32>
    %49 = vector.broadcast %48 : vector<1x128xf32> to vector<8x128xf32>
    %50 = arith.addf %47, %49 : vector<8x128xf32>
    %c0_22 = arith.constant 0 : index
    %c0_23 = arith.constant 0 : index
    %51 = vector.load %arg7[%c0_22, %c0_23] : memref<8x128xf32, #tpu.memory_space<vmem>>, vector<8x128xf32>
    tpu.vector_store %arg7[%c0_22, %c0_23], %50 {strides = array<i32>} : memref<8x128xf32, #tpu.memory_space<vmem>>, vector<8x128xf32>,
    return
  }
  func.func @transform_0(%arg0: i32) -> (i32, i32, i32) {
    %c0_i32 = arith.constant 0 : i32
    %c0_i32_0 = arith.constant 0 : i32
    %c0_i32_1 = arith.constant 0 : i32
    return %arg0, %c0_i32, %c0_i32_0 : i32, i32, i32
  }
  func.func @transform_1(%arg0: i32) -> (i32, i32) {
    %c0_i32 = arith.constant 0 : i32
    %c0_i32_0 = arith.constant 0 : i32
    %c0_i32_1 = arith.constant 0 : i32
    return %c0_i32, %c0_i32_0 : i32, i32
  }
  func.func @transform_2(%arg0: i32) -> (i32, i32) {
    %c0_i32 = arith.constant 0 : i32
    %c0_i32_0 = arith.constant 0 : i32
    %c0_i32_1 = arith.constant 0 : i32
    return %c0_i32, %c0_i32_0 : i32, i32
  }
  func.func @transform_3(%arg0: i32) -> (i32, i32) {
    %c0_i32 = arith.constant 0 : i32
    %c0_i32_0 = arith.constant 0 : i32
    %c0_i32_1 = arith.constant 0 : i32
    return %c0_i32, %c0_i32_0 : i32, i32
  }
  func.func @transform_4(%arg0: i32) -> (i32, i32) {
    %c0_i32 = arith.constant 0 : i32
    %c0_i32_0 = arith.constant 0 : i32
    %c0_i32_1 = arith.constant 0 : i32
    return %c0_i32, %c0_i32_0 : i32, i32
  }
  func.func @transform_5(%arg0: i32) -> (i32, i32) {
    %c0_i32 = arith.constant 0 : i32
    %c0_i32_0 = arith.constant 0 : i32
    %c0_i32_1 = arith.constant 0 : i32
    return %c0_i32, %c0_i32_0 : i32, i32
  }
  func.func @transform_6(%arg0: i32) -> (i32, i32) {
    %c0_i32 = arith.constant 0 : i32
    %c0_i32_0 = arith.constant 0 : i32
    return %arg0, %c0_i32 : i32, i32
  }
}

module attributes {stable_mosaic.version = 11 : i64} {
  func.func @speaker_encoder_kernel(%arg0: i32, %arg1: memref<8x8x128xbf16, #tpu.memory_space<vmem>>, %arg2: memref<128x128xbf16, #tpu.memory_space<vmem>>, %arg3: memref<128x128xbf16, #tpu.memory_space<vmem>>, %arg4: memref<128x128xbf16, #tpu.memory_space<vmem>>, %arg5: memref<4x128xf32, #tpu.memory_space<vmem>>, %arg6: memref<1x128xf32, #tpu.memory_space<vmem>>, %arg7: memref<8x128xf32, #tpu.memory_space<vmem>>) attributes {dimension_semantics = [#tpu.dimension_semantics<parallel>], iteration_bounds = array<i64: 1>, scalar_prefetch = 0 : i64, scratch_operands = 0 : i64, tpu.core_type = #tpu.core_type<tc>, window_params = [{transform_indices = @transform_0, window_bounds = array<i64: 8, 8, 128>}, {pipeline_mode = #tpu.pipeline_mode<synchronous>, transform_indices = @transform_1, window_bounds = array<i64: 128, 128>}, {pipeline_mode = #tpu.pipeline_mode<synchronous>, transform_indices = @transform_2, window_bounds = array<i64: 128, 128>}, {pipeline_mode = #tpu.pipeline_mode<synchronous>, transform_indices = @transform_3, window_bounds = array<i64: 128, 128>}, {pipeline_mode = #tpu.pipeline_mode<synchronous>, transform_indices = @transform_4, window_bounds = array<i64: 4, 128>}, {pipeline_mode = #tpu.pipeline_mode<synchronous>, transform_indices = @transform_5, window_bounds = array<i64: 1, 128>}, {transform_indices = @transform_6, window_bounds = array<i64: 8, 128>}]} {
    %c0 = arith.constant 0 : index
    %c0_0 = arith.constant 0 : index
    %c0_1 = arith.constant 0 : index
    %0 = vector.load %arg1[%c0, %c0_0, %c0_1] : memref<8x8x128xbf16, #tpu.memory_space<vmem>>, vector<8x8x128xbf16>
    %c0_2 = arith.constant 0 : index
    %c0_3 = arith.constant 0 : index
    %1 = vector.load %arg5[%c0_2, %c0_3] : memref<4x128xf32, #tpu.memory_space<vmem>>, vector<1x128xf32>
    %c1 = arith.constant 1 : index
    %c0_4 = arith.constant 0 : index
    %2 = vector.load %arg5[%c1, %c0_4] : memref<4x128xf32, #tpu.memory_space<vmem>>, vector<1x128xf32>
    %3 = arith.truncf %2 : vector<1x128xf32> to vector<1x128xbf16>
    %c2 = arith.constant 2 : index
    %c0_5 = arith.constant 0 : index
    %4 = vector.load %arg5[%c2, %c0_5] : memref<4x128xf32, #tpu.memory_space<vmem>>, vector<1x128xf32>
    %c3 = arith.constant 3 : index
    %c0_6 = arith.constant 0 : index
    %5 = vector.load %arg5[%c3, %c0_6] : memref<4x128xf32, #tpu.memory_space<vmem>>, vector<1x1xf32>
    %6 = vector.shape_cast %0 : vector<8x8x128xbf16> to vector<64x128xbf16>
    %c0_7 = arith.constant 0 : index
    %c0_8 = arith.constant 0 : index
    %7 = vector.load %arg2[%c0_7, %c0_8] : memref<128x128xbf16, #tpu.memory_space<vmem>>, vector<128x128xbf16>
    %cst = arith.constant dense<0.000000e+00> : vector<64x128xf32>
    %8 = tpu.matmul %6, %7, %cst {dimension_numbers = #tpu.dot_dimension_numbers<[1], [0], [0], [1], [0, 0, 1, 1], [], []>} : vector<64x128xbf16>, vector<128x128xbf16>, vector<64x128xf32> -> vector<64x128xf32>
    %9 = vector.broadcast %1 : vector<1x128xf32> to vector<64x128xf32>
    %10 = arith.addf %8, %9 : vector<64x128xf32>
    %11 = math.tanh %10 : vector<64x128xf32>
    %12 = arith.truncf %11 : vector<64x128xf32> to vector<64x128xbf16>
    %13 = vector.shape_cast %12 : vector<64x128xbf16> to vector<8x8x128xbf16>
    %14 = vector.shape_cast %3 : vector<1x128xbf16> to vector<1x1x128xbf16>
    %15 = vector.broadcast %14 : vector<1x1x128xbf16> to vector<8x8x128xbf16>
    %16 = arith.mulf %13, %15 : vector<8x8x128xbf16>
    %17 = arith.extf %16 : vector<8x8x128xbf16> to vector<8x8x128xf32>
    %cst_9 = arith.constant dense<0.000000e+00> : vector<8x8xf32>
    %18 = vector.multi_reduction <add>, %17, %cst_9 [2] : vector<8x8x128xf32> to vector<8x8xf32>
    %cst_10 = arith.constant dense<0xFF800000> : vector<8xf32>
    %19 = vector.multi_reduction <maximumf>, %18, %cst_10 [1] : vector<8x8xf32> to vector<8xf32>
    %20 = vector.shape_cast %19 : vector<8xf32> to vector<8x1xf32>
    %21 = vector.broadcast %20 : vector<8x1xf32> to vector<8x8xf32>
    %22 = arith.subf %18, %21 : vector<8x8xf32>
    %23 = math.exp %22 : vector<8x8xf32>
    %cst_11 = arith.constant dense<0.000000e+00> : vector<8xf32>
    %24 = vector.multi_reduction <add>, %23, %cst_11 [1] : vector<8x8xf32> to vector<8xf32>
    %25 = vector.shape_cast %24 : vector<8xf32> to vector<8x1xf32>
    %26 = tpu.reciprocal %25 {approx = true} : vector<8x1xf32> -> vector<8x1xf32>
    %27 = vector.broadcast %26 : vector<8x1xf32> to vector<8x8xf32>
    %28 = arith.mulf %23, %27 : vector<8x8xf32>
    %29 = vector.shape_cast %28 : vector<8x8xf32> to vector<8x8x1xf32>
    %30 = arith.truncf %29 : vector<8x8x1xf32> to vector<8x8x1xbf16>
    %31 = vector.broadcast %30 : vector<8x8x1xbf16> to vector<8x8x128xbf16>
    %32 = arith.mulf %31, %0 : vector<8x8x128xbf16>
    %33 = arith.extf %32 : vector<8x8x128xbf16> to vector<8x8x128xf32>
    %cst_12 = arith.constant dense<0.000000e+00> : vector<8x128xf32>
    %34 = vector.multi_reduction <add>, %33, %cst_12 [1] : vector<8x8x128xf32> to vector<8x128xf32>
    %35 = arith.truncf %34 : vector<8x128xf32> to vector<8x128xbf16>
    %c0_13 = arith.constant 0 : index
    %c0_14 = arith.constant 0 : index
    %36 = vector.load %arg3[%c0_13, %c0_14] : memref<128x128xbf16, #tpu.memory_space<vmem>>, vector<128x128xbf16>
    %cst_15 = arith.constant dense<0.000000e+00> : vector<8x128xf32>
    %37 = tpu.matmul %35, %36, %cst_15 {dimension_numbers = #tpu.dot_dimension_numbers<[1], [0], [0], [1], [0, 0, 1, 1], [], []>} : vector<8x128xbf16>, vector<128x128xbf16>, vector<8x128xf32> -> vector<8x128xf32>
    %38 = vector.broadcast %4 : vector<1x128xf32> to vector<8x128xf32>
    %39 = arith.addf %37, %38 : vector<8x128xf32>
    %cst_16 = arith.constant 0.000000e+00 : f32
    %40 = vector.broadcast %cst_16 : f32 to vector<8x128xf32>
    %41 = arith.cmpf oge, %39, %40 : vector<8x128xf32>
    %42 = vector.broadcast %5 : vector<1x1xf32> to vector<8x128xf32>
    %43 = arith.mulf %42, %39 : vector<8x128xf32>
    %44 = arith.select %41, %39, %43 : vector<8x128xi1>, vector<8x128xf32>
    %45 = arith.truncf %44 : vector<8x128xf32> to vector<8x128xbf16>
    %c0_17 = arith.constant 0 : index
    %c0_18 = arith.constant 0 : index
    %46 = vector.load %arg4[%c0_17, %c0_18] : memref<128x128xbf16, #tpu.memory_space<vmem>>, vector<128x128xbf16>
    %cst_19 = arith.constant dense<0.000000e+00> : vector<8x128xf32>
    %47 = tpu.matmul %45, %46, %cst_19 {dimension_numbers = #tpu.dot_dimension_numbers<[1], [0], [0], [1], [0, 0, 1, 1], [], []>} : vector<8x128xbf16>, vector<128x128xbf16>, vector<8x128xf32> -> vector<8x128xf32>
    %c0_20 = arith.constant 0 : index
    %c0_21 = arith.constant 0 : index
    %48 = vector.load %arg6[%c0_20, %c0_21] : memref<1x128xf32, #tpu.memory_space<vmem>>, vector<1x128xf32>
    %49 = vector.broadcast %48 : vector<1x128xf32> to vector<8x128xf32>
    %50 = arith.addf %47, %49 : vector<8x128xf32>
    %c0_22 = arith.constant 0 : index
    %c0_23 = arith.constant 0 : index
    %51 = vector.load %arg7[%c0_22, %c0_23] : memref<8x128xf32, #tpu.memory_space<vmem>>, vector<8x128xf32>
    tpu.vector_store %arg7[%c0_22, %c0_23], %50 {strides = array<i32>} : memref<8x128xf32, #tpu.memory_space<vmem>>, vector<8x128xf32>,
    return
  }
  func.func @transform_0(%arg0: i32) -> (i32, i32, i32) {
    %c0_i32 = arith.constant 0 : i32
    %c0_i32_0 = arith.constant 0 : i32
    %c0_i32_1 = arith.constant 0 : i32
    return %arg0, %c0_i32, %c0_i32_0 : i32, i32, i32
  }
  func.func @transform_1(%arg0: i32) -> (i32, i32) {
    %c0_i32 = arith.constant 0 : i32
    %c0_i32_0 = arith.constant 0 : i32
    %c0_i32_1 = arith.constant 0 : i32
    return %c0_i32, %c0_i32_0 : i32, i32
  }
  func.func @transform_2(%arg0: i32) -> (i32, i32) {
    %c0_i32 = arith.constant 0 : i32
    %c0_i32_0 = arith.constant 0 : i32
    %c0_i32_1 = arith.constant 0 : i32
    return %c0_i32, %c0_i32_0 : i32, i32
  }
  func.func @transform_3(%arg0: i32) -> (i32, i32) {
    %c0_i32 = arith.constant 0 : i32
    %c0_i32_0 = arith.constant 0 : i32
    %c0_i32_1 = arith.constant 0 : i32
    return %c0_i32, %c0_i32_0 : i32, i32
  }
  func.func @transform_4(%arg0: i32) -> (i32, i32) {
    %c0_i32 = arith.constant 0 : i32
    %c0_i32_0 = arith.constant 0 : i32
    %c0_i32_1 = arith.constant 0 : i32
    return %c0_i32, %c0_i32_0 : i32, i32
  }
  func.func @transform_5(%arg0: i32) -> (i32, i32) {
    %c0_i32 = arith.constant 0 : i32
    %c0_i32_0 = arith.constant 0 : i32
    %c0_i32_1 = arith.constant 0 : i32
    return %c0_i32, %c0_i32_0 : i32, i32
  }
  func.func @transform_6(%arg0: i32) -> (i32, i32) {
    %c0_i32 = arith.constant 0 : i32
    %c0_i32_0 = arith.constant 0 : i32
    return %arg0, %c0_i32 : i32, i32
  }
}

</mosaic_0001>

<llo_original>
// kernel: tpu_custom_call.1
$region0: #{tpu_custom_call.1}
  #allocation0 [shape = 'u32[]', space=smem, size = 0x4, offset = 0x4, fixed_abs, tag = 'smem constant byte address 0x4 - core index']
  #allocation1 [shape = 'u32[144,128]{1,0:T(1,128)}', space=vmem, size = 0x12000, scoped, tag = 'internal scratch']
  %s0 = inlined_call_operand.hbm [shape: bf16[8,8,128], index: 0, kind: input, shape index: {}]
  %s1 = inlined_call_operand.hbm [shape: bf16[128,128], index: 1, kind: input, shape index: {}]
  %s2 = inlined_call_operand.hbm [shape: bf16[128,128], index: 2, kind: input, shape index: {}]
  %s3 = inlined_call_operand.hbm [shape: bf16[128,128], index: 3, kind: input, shape index: {}]
  %s4 = inlined_call_operand.hbm [shape: f32[4,128], index: 4, kind: input, shape index: {}]
  %s5 = inlined_call_operand.hbm [shape: f32[1,128], index: 5, kind: input, shape index: {}]
  %s6 = inlined_call_operand.hbm [shape: f32[8,128], index: 6, kind: output, shape index: {}]
  %s7 = sld [smem:[#allocation0]]
  $region58: #{tpu_custom_call.1} parent=0
    _
  %s9 = ssub.s32 1, %s7
  %s10 = scalar_select 0, %s9, %s7
  $region1: #{tpu_custom_call.1} parent=0
    #allocation2 [shape = 'u8[16384]{0}', space=vmem, size = 0x4000, scoped, tag = 'input window, operand 0, single buffered']
    #allocation3 [shape = 's32[1]{0}', space=sflag, size = 0x4, scoped, tag = 'scoped memory for tpu_custom_call.1']
    #allocation4 [shape = 's32[1]{0}', space=sflag, size = 0x4, scoped, tag = 'scoped memory for tpu_custom_call.1']
    #allocation5 [shape = 'u8[32768]{0}', space=vmem, size = 0x8000, scoped, tag = 'input window, operand 1, single buffered']
    #allocation6 [shape = 's32[1]{0}', space=sflag, size = 0x4, scoped, tag = 'scoped memory for tpu_custom_call.1']
    #allocation7 [shape = 'u8[32768]{0}', space=vmem, size = 0x8000, scoped, tag = 'input window, operand 2, single buffered']
    #allocation8 [shape = 'u8[32768]{0}', space=vmem, size = 0x8000, scoped, tag = 'input window, operand 3, single buffered']
    #allocation9 [shape = 's32[1]{0}', space=sflag, size = 0x4, scoped, tag = 'scoped memory for tpu_custom_call.1']
    #allocation10 [shape = 'u8[2048]{0}', space=vmem, size = 0x800, scoped, tag = 'input window, operand 4, single buffered']
    #allocation11 [shape = 'u8[512]{0}', space=vmem, size = 0x400, scoped, tag = 'input window, operand 5, single buffered']
    #allocation12 [shape = 's32[1]{0}', space=sflag, size = 0x4, scoped, tag = 'scoped memory for tpu_custom_call.1']
    #allocation13 [shape = 'u8[4096]{0}', space=vmem, size = 0x1000, scoped, tag = 'output window, operand 0, single buffered']
    %11 = vsyncpa [#allocation3], 0
    %12 = vsyncpa [#allocation6], 0
    %13 = vsyncpa [#allocation9], 0
    %14 = vsyncpa [#allocation12], 0
    %15 = vsyncpa [#allocation4], 0
    // Predicated region
    $region2: #{tpu_custom_call.1} parent=1 // pred_check
      _
    $region3: #{tpu_custom_call.1} parent=1 // pred_check_branch
      %17 = sbr.rel (0) target = $region5
    $region4: #{tpu_custom_call.1} parent=1 // pred_region
      %s19 = ssub.s32 512, 512
      %20 = vsyncadd [#allocation3], %s19
      %s21 = sshll.u32 [#allocation2], 4
      %s22 = int_to_ptr.vmem [resolvable:$true] %s21
      %27 = dma.hbm_to_vmem [thread:$0]  %s0, 512, %s22, [#allocation3], 64, 64, 4
    $region5: #{tpu_custom_call.1} parent=1 // pred_fallthru
      _
    // Predicated region
    $region6: #{tpu_custom_call.1} parent=1 // pred_check
      _
    $region7: #{tpu_custom_call.1} parent=1 // pred_check_branch
      %29 = sbr.rel (0) target = $region9
    $region8: #{tpu_custom_call.1} parent=1 // pred_region
      %s31 = ssub.s32 1024, 1024
      %32 = vsyncadd [#allocation6], %s31
      %s33 = sshll.u32 [#allocation5], 4
      %s34 = int_to_ptr.vmem [resolvable:$true] %s33
      %39 = dma.hbm_to_vmem [thread:$0]  %s1, 1024, %s34, [#allocation6], 64, 64, 4
    $region9: #{tpu_custom_call.1} parent=1 // pred_fallthru
      _
    // Predicated region
    $region10: #{tpu_custom_call.1} parent=1 // pred_check
      _
    $region11: #{tpu_custom_call.1} parent=1 // pred_check_branch
      %41 = sbr.rel (0) target = $region13
    $region12: #{tpu_custom_call.1} parent=1 // pred_region
      %s43 = ssub.s32 1024, 1024
      %44 = vsyncadd [#allocation6], %s43
      %s45 = sshll.u32 [#allocation7], 4
      %s46 = int_to_ptr.vmem [resolvable:$true] %s45
      %51 = dma.hbm_to_vmem [thread:$0]  %s2, 1024, %s46, [#allocation6], 64, 64, 4
    $region13: #{tpu_custom_call.1} parent=1 // pred_fallthru
      _
    // Predicated region
    $region14: #{tpu_custom_call.1} parent=1 // pred_check
      _
    $region15: #{tpu_custom_call.1} parent=1 // pred_check_branch
      %53 = sbr.rel (0) target = $region17
    $region16: #{tpu_custom_call.1} parent=1 // pred_region
      %s55 = ssub.s32 1024, 1024
      %56 = vsyncadd [#allocation9], %s55
      %s57 = sshll.u32 [#allocation8], 4
      %s58 = int_to_ptr.vmem [resolvable:$true] %s57
      %63 = dma.hbm_to_vmem [thread:$0]  %s3, 1024, %s58, [#allocation9], 64, 64, 4
    $region17: #{tpu_custom_call.1} parent=1 // pred_fallthru
      _
    // Predicated region
    $region18: #{tpu_custom_call.1} parent=1 // pred_check
      _
    $region19: #{tpu_custom_call.1} parent=1 // pred_check_branch
      %65 = sbr.rel (0) target = $region21
    $region20: #{tpu_custom_call.1} parent=1 // pred_region
      %s67 = ssub.s32 64, 64
      %68 = vsyncadd [#allocation9], %s67
      %s70 = sshll.u32 [#allocation10], 4
      %s71 = int_to_ptr.vmem [resolvable:$true] %s70
      %73 = dma.hbm_to_vmem [thread:$0]  %s4, 64, %s71, [#allocation9]
    $region21: #{tpu_custom_call.1} parent=1 // pred_fallthru
      _
    // Predicated region
    $region22: #{tpu_custom_call.1} parent=1 // pred_check
      _
    $region23: #{tpu_custom_call.1} parent=1 // pred_check_branch
      %75 = sbr.rel (0) target = $region25
    $region24: #{tpu_custom_call.1} parent=1 // pred_region
      %s77 = ssub.s32 16, 16
      %78 = vsyncadd [#allocation12], %s77
      %s80 = sshll.u32 [#allocation11], 4
      %s81 = int_to_ptr.vmem [resolvable:$true] %s80
      %83 = dma.hbm_to_vmem [thread:$0]  %s5, 16, %s81, [#allocation12]
    $region25: #{tpu_custom_call.1} parent=1 // pred_fallthru
      _
    // Predicated region
    $region26: #{tpu_custom_call.1} parent=1 // pred_check
      _
    $region27: #{tpu_custom_call.1} parent=1 // pred_check_branch
      %85 = sbr.rel (0) target = $region29
    $region28: #{tpu_custom_call.1} parent=1 // pred_region
      %86 = dma.done [#allocation3], 512
    $region29: #{tpu_custom_call.1} parent=1 // pred_fallthru
      _
    // Predicated region
    $region30: #{tpu_custom_call.1} parent=1 // pred_check
      _
    $region31: #{tpu_custom_call.1} parent=1 // pred_check_branch
      %88 = sbr.rel (0) target = $region33
    $region32: #{tpu_custom_call.1} parent=1 // pred_region
      %89 = dma.done [#allocation6], 1024
    $region33: #{tpu_custom_call.1} parent=1 // pred_fallthru
      _
    // Predicated region
    $region34: #{tpu_custom_call.1} parent=1 // pred_check
      _
    $region35: #{tpu_custom_call.1} parent=1 // pred_check_branch
      %91 = sbr.rel (0) target = $region37
    $region36: #{tpu_custom_call.1} parent=1 // pred_region
      %92 = dma.done [#allocation6], 1024
    $region37: #{tpu_custom_call.1} parent=1 // pred_fallthru
      _
    // Predicated region
    $region38: #{tpu_custom_call.1} parent=1 // pred_check
      _
    $region39: #{tpu_custom_call.1} parent=1 // pred_check_branch
      %94 = sbr.rel (0) target = $region41
    $region40: #{tpu_custom_call.1} parent=1 // pred_region
      %95 = dma.done [#allocation9], 1024
    $region41: #{tpu_custom_call.1} parent=1 // pred_fallthru
      _
    // Predicated region
    $region42: #{tpu_custom_call.1} parent=1 // pred_check
      _
    $region43: #{tpu_custom_call.1} parent=1 // pred_check_branch
      %97 = sbr.rel (0) target = $region45
    $region44: #{tpu_custom_call.1} parent=1 // pred_region
      %98 = dma.done [#allocation9], 64
    $region45: #{tpu_custom_call.1} parent=1 // pred_fallthru
      _
    // Predicated region
    $region46: #{tpu_custom_call.1} parent=1 // pred_check
      _
    $region47: #{tpu_custom_call.1} parent=1 // pred_check_branch
      %100 = sbr.rel (0) target = $region49
    $region48: #{tpu_custom_call.1} parent=1 // pred_region
      %101 = dma.done [#allocation12], 16
    $region49: #{tpu_custom_call.1} parent=1 // pred_fallthru
      _
    %v103 = vld [vmem:[#allocation2] sm:$0xf]
    %v104 = vld [vmem:[#allocation2 + $0x4] sm:$0xf]
    %v105 = vld [vmem:[#allocation2 + $0x8] sm:$0xf]
    %v106 = vld [vmem:[#allocation2 + $0xc] sm:$0xf]
    %v107 = vld [vmem:[#allocation2 + $0x10] sm:$0xf]
    %v108 = vld [vmem:[#allocation2 + $0x14] sm:$0xf]
    %v109 = vld [vmem:[#allocation2 + $0x18] sm:$0xf]
    %v110 = vld [vmem:[#allocation2 + $0x1c] sm:$0xf]
    %v111 = vld [vmem:[#allocation10] sm:$0x1]
    %v112 = vld [vmem:[#allocation10 + $0x1] sm:$0x1]
    %v113 = vpack.c.bf16 %v112, %v112
    %v114 = vld [vmem:[#allocation10 + $0x2] sm:$0x1]
    %v115 = vld [vmem:[#allocation10 + $0x3] sm:$0x1]
    %v116 = vld [vmem:[#allocation5] sm:$0xf]
    %v117 = vld [vmem:[#allocation5 + $0x4] sm:$0xf]
    %v118 = vld [vmem:[#allocation5 + $0x8] sm:$0xf]
    %v119 = vld [vmem:[#allocation5 + $0xc] sm:$0xf]
    %v120 = vld [vmem:[#allocation5 + $0x10] sm:$0xf]
    %v121 = vld [vmem:[#allocation5 + $0x14] sm:$0xf]
    %v122 = vld [vmem:[#allocation5 + $0x18] sm:$0xf]
    %v123 = vld [vmem:[#allocation5 + $0x1c] sm:$0xf]
    %v124 = vld [vmem:[#allocation5 + $0x20] sm:$0xf]
    %v125 = vld [vmem:[#allocation5 + $0x24] sm:$0xf]
    %v126 = vld [vmem:[#allocation5 + $0x28] sm:$0xf]
    %v127 = vld [vmem:[#allocation5 + $0x2c] sm:$0xf]
    %v128 = vld [vmem:[#allocation5 + $0x30] sm:$0xf]
    %v129 = vld [vmem:[#allocation5 + $0x34] sm:$0xf]
    %v130 = vld [vmem:[#allocation5 + $0x38] sm:$0xf]
    %v131 = vld [vmem:[#allocation5 + $0x3c] sm:$0xf]
    %v132 = vlaneseq
    %v133 = vshrl.u32 %v132, 7
    %v134 = vsub.s32 0, %v133
    %v135 = vrot.slane %v111, %v134
    %v144 = vunpack.c.l.b16 %v103
    %v145 = vunpack.c.l.b16 %v104
    %v146 = vunpack.c.l.b16 %v105
    %v147 = vunpack.c.l.b16 %v106
    %v148 = vunpack.c.l.b16 %v107
    %v149 = vunpack.c.l.b16 %v108
    %v150 = vunpack.c.l.b16 %v109
    %v151 = vunpack.c.l.b16 %v110
    %v152 = vpack.c.b16 %v145, %v144
    %v153 = vpack.c.b16 %v147, %v146
    %v154 = vpack.c.b16 %v149, %v148
    %v155 = vpack.c.b16 %v151, %v150
    %v176 = vunpack.c.l.b16 %v116
    %v177 = vunpack.c.l.b16 %v117
    %v178 = vunpack.c.l.b16 %v118
    %v179 = vunpack.c.l.b16 %v119
    %v180 = vunpack.c.l.b16 %v120
    %v181 = vunpack.c.l.b16 %v121
    %v182 = vunpack.c.l.b16 %v122
    %v183 = vunpack.c.l.b16 %v123
    %v184 = vunpack.c.l.b16 %v124
    %v185 = vunpack.c.l.b16 %v125
    %v186 = vunpack.c.l.b16 %v126
    %v187 = vunpack.c.l.b16 %v127
    %v188 = vunpack.c.l.b16 %v128
    %v189 = vunpack.c.l.b16 %v129
    %v190 = vunpack.c.l.b16 %v130
    %v191 = vunpack.c.l.b16 %v131
    %v192 = vpack.c.b16 %v177, %v176
    %v193 = vpack.c.b16 %v179, %v178
    %v194 = vpack.c.b16 %v181, %v180
    %v195 = vpack.c.b16 %v183, %v182
    %v196 = vpack.c.b16 %v185, %v184
    %v197 = vpack.c.b16 %v187, %v186
    %v198 = vpack.c.b16 %v189, %v188
    %v199 = vpack.c.b16 %v191, %v190
    %208 = vmatprep.subr.bf16.mxu0 0
    %209 = vmatpush1.bf16.msra.mxu0 %v192
    %210 = vmatprep.subr.bf16.mxu0 0
    %211 = vmatpush1.bf16.msra.mxu0 %v193
    %212 = vmatprep.subr.bf16.mxu0 0
    %213 = vmatpush1.bf16.msra.mxu0 %v194
    %214 = vmatprep.subr.bf16.mxu0 0
    %215 = vmatpush1.bf16.msra.mxu0 %v195
    %216 = vmatprep.subr.bf16.mxu0 0
    %217 = vmatpush1.bf16.msra.mxu0 %v196
    %218 = vmatprep.subr.bf16.mxu0 0
    %219 = vmatpush1.bf16.msra.mxu0 %v197
    %220 = vmatprep.subr.bf16.mxu0 0
    %221 = vmatpush1.bf16.msra.mxu0 %v198
    %222 = vmatprep.subr.bf16.mxu0 0
    %223 = vmatpush1.bf16.msra.mxu0 %v199
    %224 = vmatprep.subr.bf16.mxu0 0
    %225 = vmatpush1.bf16.msra.mxu0 0
    %226 = vmatprep.subr.bf16.mxu0 0
    %227 = vmatpush1.bf16.msra.mxu0 0
    %228 = vmatprep.subr.bf16.mxu0 0
    %229 = vmatpush1.bf16.msra.mxu0 0
    %230 = vmatprep.subr.bf16.mxu0 0
    %231 = vmatpush1.bf16.msra.mxu0 0
    %232 = vmatprep.subr.bf16.mxu0 0
    %233 = vmatpush1.bf16.msra.mxu0 0
    %234 = vmatprep.subr.bf16.mxu0 0
    %235 = vmatpush1.bf16.msra.mxu0 0
    %236 = vmatprep.subr.bf16.mxu0 0
    %237 = vmatpush1.bf16.msra.mxu0 0
    %238 = vmatprep.subr.bf16.mxu0 0
    %239 = vmatpush1.bf16.msra.mxu0 0
    %240 = vmatprep.mubr.bf16.mxu0 0
    %241 = vmatmul.mubr.bf16.gmra.mrb[0].mxu0 %v152
    %v242 = vpop.f32.mrb[0].mxu0
    %v243 = vadd.f32 %v135, %v242
    %v244 = vpop.f32.mrb[0].mxu0
    %v245 = vpop.f32.mrb[0].mxu0
    %v246 = vadd.f32 %v135, %v245
    %v247 = vpop.f32.mrb[0].mxu0
    %248 = vmatprep.mubr.bf16.mxu0 0
    %249 = vmatmul.mubr.bf16.gmra.mrb[0].mxu0 %v153
    %v250 = vpop.f32.mrb[0].mxu0
    %v251 = vadd.f32 %v135, %v250
    %v252 = vpop.f32.mrb[0].mxu0
    %v253 = vpop.f32.mrb[0].mxu0
    %v254 = vadd.f32 %v135, %v253
    %v255 = vpop.f32.mrb[0].mxu0
    %256 = vmatprep.mubr.bf16.mxu0 0
    %257 = vmatmul.mubr.bf16.gmra.mrb[0].mxu0 %v154
    %v258 = vpop.f32.mrb[0].mxu0
    %v259 = vadd.f32 %v135, %v258
    %v260 = vpop.f32.mrb[0].mxu0
    %v261 = vpop.f32.mrb[0].mxu0
    %v262 = vadd.f32 %v135, %v261
    %v263 = vpop.f32.mrb[0].mxu0
    %264 = vmatprep.mubr.bf16.mxu0 0
    %265 = vmatmul.mubr.bf16.gmra.mrb[0].mxu0 %v155
    %v266 = vpop.f32.mrb[0].mxu0
    %v267 = vadd.f32 %v135, %v266
    %v268 = vpop.f32.mrb[0].mxu0
    %v269 = vpop.f32.mrb[0].mxu0
    %v270 = vadd.f32 %v135, %v269
    %v271 = vpop.f32.mrb[0].mxu0
    %272 = vdwg.mxu0
    %v273 = vtanh.pop %v243
    %v274 = vtanh.pop %v246
    %v275 = vtanh.pop %v251
    %v276 = vtanh.pop %v254
    %v277 = vtanh.pop %v259
    %v278 = vtanh.pop %v262
    %v279 = vtanh.pop %v267
    %v280 = vtanh.pop %v270
    %v281 = vpack.c.bf16 %v274, %v273
    %v282 = vpack.c.bf16 %v276, %v275
    %v283 = vpack.c.bf16 %v278, %v277
    %v284 = vpack.c.bf16 %v280, %v279
    %v289 = vunpack.c.l.b16 %v281
    %v290 = vunpack.c.h.b16 %v281
    %v291 = vunpack.c.l.b16 %v282
    %v292 = vunpack.c.h.b16 %v282
    %v293 = vunpack.c.l.b16 %v283
    %v294 = vunpack.c.h.b16 %v283
    %v295 = vunpack.c.l.b16 %v284
    %v296 = vunpack.c.h.b16 %v284
    %v297 = vpack.c.b16 %v289, %v289
    %v298 = vpack.c.b16 %v290, %v290
    %v299 = vpack.c.b16 %v291, %v291
    %v300 = vpack.c.b16 %v292, %v292
    %v301 = vpack.c.b16 %v293, %v293
    %v302 = vpack.c.b16 %v294, %v294
    %v303 = vpack.c.b16 %v295, %v295
    %v304 = vpack.c.b16 %v296, %v296
    %v314 = vpack.i.b16 %v113, %v113
    %v316 = vlaneseq
    %v317 = vshrl.u32 %v316, 7
    %v318 = vsub.s32 0, %v317
    %v319 = vrot.slane %v314, %v318
    %v320 = vmul.bf16 %v297, %v319
    %v321 = vmul.bf16 %v298, %v319
    %v322 = vmul.bf16 %v299, %v319
    %v323 = vmul.bf16 %v300, %v319
    %v324 = vmul.bf16 %v301, %v319
    %v325 = vmul.bf16 %v302, %v319
    %v326 = vmul.bf16 %v303, %v319
    %v327 = vmul.bf16 %v304, %v319
    %v328 = vunpack.c.l.bf16 %v320
    %v329 = vunpack.c.l.bf16 %v321
    %v330 = vunpack.c.l.bf16 %v322
    %v331 = vunpack.c.l.bf16 %v323
    %v332 = vunpack.c.l.bf16 %v324
    %v333 = vunpack.c.l.bf16 %v325
    %v334 = vunpack.c.l.bf16 %v326
    %v335 = vunpack.c.l.bf16 %v327
    %336 = vadd.xlane.f32.xlu0 %v328
    %v337 = vpop.xlane.xlu0 %336
    %338 = vadd.xlane.f32.xlu0 %v329
    %v339 = vpop.xlane.xlu0 %338
    %340 = vadd.xlane.f32.xlu0 %v330
    %v341 = vpop.xlane.xlu0 %340
    %342 = vadd.xlane.f32.xlu0 %v331
    %v343 = vpop.xlane.xlu0 %342
    %344 = vadd.xlane.f32.xlu0 %v332
    %v345 = vpop.xlane.xlu0 %344
    %346 = vadd.xlane.f32.xlu0 %v333
    %v347 = vpop.xlane.xlu0 %346
    %348 = vadd.xlane.f32.xlu0 %v334
    %v349 = vpop.xlane.xlu0 %348
    %350 = vadd.xlane.f32.xlu0 %v335
    %v351 = vpop.xlane.xlu0 %350
    %v360 = vlaneseq
    %v361 = vand.u32 %v360, 127
    %v362 = vlaneseq
    %v363 = vshrl.u32 %v362, 7
    %v364 = vsub.s32 %v361, %v363
    %v365 = vrot.slane %v337, %v364
    %v366 = vlaneseq
    %v367 = vshrl.u32 %v366, 7
    %v368 = vsub.s32 %v361, %v367
    %v369 = vrot.slane %v339, %v368
    %v370 = vlaneseq
    %v371 = vshrl.u32 %v370, 7
    %v372 = vsub.s32 %v361, %v371
    %v373 = vrot.slane %v341, %v372
    %v374 = vlaneseq
    %v375 = vshrl.u32 %v374, 7
    %v376 = vsub.s32 %v361, %v375
    %v377 = vrot.slane %v343, %v376
    %v378 = vlaneseq
    %v379 = vshrl.u32 %v378, 7
    %v380 = vsub.s32 %v361, %v379
    %v381 = vrot.slane %v345, %v380
    %v382 = vlaneseq
    %v383 = vshrl.u32 %v382, 7
    %v384 = vsub.s32 %v361, %v383
    %v385 = vrot.slane %v347, %v384
    %v386 = vlaneseq
    %v387 = vshrl.u32 %v386, 7
    %v388 = vsub.s32 %v361, %v387
    %v389 = vrot.slane %v349, %v388
    %v390 = vlaneseq
    %v391 = vshrl.u32 %v390, 7
    %v392 = vsub.s32 %v361, %v391
    %v393 = vrot.slane %v351, %v392
    %vm394 = vcmask 1041409
    %v395 = vsel %vm394, %v369, %v365
    %vm396 = vcmask 1042434
    %v397 = vsel %vm396, %v373, %v395
    %vm398 = vcmask 1043459
    %v399 = vsel %vm398, %v377, %v397
    %vm400 = vcmask 1044484
    %v401 = vsel %vm400, %v381, %v399
    %vm402 = vcmask 1045509
    %v403 = vsel %vm402, %v385, %v401
    %vm404 = vcmask 1046534
    %v405 = vsel %vm404, %v389, %v403
    %vm406 = vcmask 1047559
    %v407 = vsel %vm406, %v393, %v405
    %vm409 = vcmask 64512
    %v410 = vsel %vm409, %v407, -inf
    %411 = vmax.xlane.f32.xlu0 %v410
    %v412 = vpop.xlane.xlu0 %411
    %v414 = vlaneseq
    %v415 = vshrl.u32 %v414, 7
    %v416 = vsub.s32 0, %v415
    %v417 = vrot.slane %v412, %v416
    %v418 = vlaneseq
    %v419 = vshrl.u32 %v418, 7
    %v420 = vsub.s32 1, %v419
    %v421 = vrot.slane %v412, %v420
    %v422 = vlaneseq
    %v423 = vshrl.u32 %v422, 7
    %v424 = vsub.s32 2, %v423
    %v425 = vrot.slane %v412, %v424
    %v426 = vlaneseq
    %v427 = vshrl.u32 %v426, 7
    %v428 = vsub.s32 3, %v427
    %v429 = vrot.slane %v412, %v428
    %v430 = vlaneseq
    %v431 = vshrl.u32 %v430, 7
    %v432 = vsub.s32 4, %v431
    %v433 = vrot.slane %v412, %v432
    %v434 = vlaneseq
    %v435 = vshrl.u32 %v434, 7
    %v436 = vsub.s32 5, %v435
    %v437 = vrot.slane %v412, %v436
    %v438 = vlaneseq
    %v439 = vshrl.u32 %v438, 7
    %v440 = vsub.s32 6, %v439
    %v441 = vrot.slane %v412, %v440
    %v442 = vlaneseq
    %v443 = vshrl.u32 %v442, 7
    %v444 = vsub.s32 7, %v443
    %v445 = vrot.slane %v412, %v444
    %v454 = vsub.f32 %v337, %v417
    %v455 = vsub.f32 %v339, %v421
    %v456 = vsub.f32 %v341, %v425
    %v457 = vsub.f32 %v343, %v429
    %v458 = vsub.f32 %v345, %v433
    %v459 = vsub.f32 %v347, %v437
    %v460 = vsub.f32 %v349, %v441
    %v461 = vsub.f32 %v351, %v445
    %v462 = vmul.f32 %v454, 1.442695
    %v463 = vpow.pop %v462
    %v464 = vmul.f32 %v455, 1.442695
    %v465 = vpow.pop %v464
    %v466 = vmul.f32 %v456, 1.442695
    %v467 = vpow.pop %v466
    %v468 = vmul.f32 %v457, 1.442695
    %v469 = vpow.pop %v468
    %v470 = vmul.f32 %v458, 1.442695
    %v471 = vpow.pop %v470
    %v472 = vmul.f32 %v459, 1.442695
    %v473 = vpow.pop %v472
    %v474 = vmul.f32 %v460, 1.442695
    %v475 = vpow.pop %v474
    %v476 = vmul.f32 %v461, 1.442695
    %v477 = vpow.pop %v476
    %486 = vset.pattern.permute.xlu0 0
    %487 = vperm.xlu0 %486, %v463
    %v488 = vpop.permute.xlu0 %487
    %489 = vset.pattern.permute.xlu0 0
    %490 = vperm.xlu0 %489, %v465
    %v491 = vpop.permute.xlu0 %490
    %492 = vset.pattern.permute.xlu0 0
    %493 = vperm.xlu0 %492, %v467
    %v494 = vpop.permute.xlu0 %493
    %495 = vset.pattern.permute.xlu0 0
    %496 = vperm.xlu0 %495, %v469
    %v497 = vpop.permute.xlu0 %496
    %498 = vset.pattern.permute.xlu0 0
    %499 = vperm.xlu0 %498, %v471
    %v500 = vpop.permute.xlu0 %499
    %501 = vset.pattern.permute.xlu0 0
    %502 = vperm.xlu0 %501, %v473
    %v503 = vpop.permute.xlu0 %502
    %504 = vset.pattern.permute.xlu0 0
    %505 = vperm.xlu0 %504, %v475
    %v506 = vpop.permute.xlu0 %505
    %507 = vset.pattern.permute.xlu0 0
    %508 = vperm.xlu0 %507, %v477
    %v509 = vpop.permute.xlu0 %508
    %v510 = vlaneseq
    %v511 = vshrl.u32 %v510, 7
    %v512 = vsub.s32 %v361, %v511
    %v513 = vrot.slane %v488, %v512
    %v514 = vlaneseq
    %v515 = vshrl.u32 %v514, 7
    %v516 = vsub.s32 %v361, %v515
    %v517 = vrot.slane %v491, %v516
    %v518 = vlaneseq
    %v519 = vshrl.u32 %v518, 7
    %v520 = vsub.s32 %v361, %v519
    %v521 = vrot.slane %v494, %v520
    %v522 = vlaneseq
    %v523 = vshrl.u32 %v522, 7
    %v524 = vsub.s32 %v361, %v523
    %v525 = vrot.slane %v497, %v524
    %v526 = vlaneseq
    %v527 = vshrl.u32 %v526, 7
    %v528 = vsub.s32 %v361, %v527
    %v529 = vrot.slane %v500, %v528
    %v530 = vlaneseq
    %v531 = vshrl.u32 %v530, 7
    %v532 = vsub.s32 %v361, %v531
    %v533 = vrot.slane %v503, %v532
    %v534 = vlaneseq
    %v535 = vshrl.u32 %v534, 7
    %v536 = vsub.s32 %v361, %v535
    %v537 = vrot.slane %v506, %v536
    %v538 = vlaneseq
    %v539 = vshrl.u32 %v538, 7
    %v540 = vsub.s32 %v361, %v539
    %v541 = vrot.slane %v509, %v540
    %v542 = vsel %vm394, %v517, %v513
    %v543 = vsel %vm396, %v521, %v542
    %v544 = vsel %vm398, %v525, %v543
    %v545 = vsel %vm400, %v529, %v544
    %v546 = vsel %vm402, %v533, %v545
    %v547 = vsel %vm404, %v537, %v546
    %v548 = vsel %vm406, %v541, %v547
    %v550 = vsel %vm409, %v548, 0.0
    %551 = vadd.xlane.f32.xlu0 %v550
    %v552 = vpop.xlane.xlu0 %551
    %v553 = vrcp.pop %v552
    %v555 = vlaneseq
    %v556 = vshrl.u32 %v555, 7
    %v557 = vsub.s32 0, %v556
    %v558 = vrot.slane %v553, %v557
    %v559 = vlaneseq
    %v560 = vshrl.u32 %v559, 7
    %v561 = vsub.s32 1, %v560
    %v562 = vrot.slane %v553, %v561
    %v563 = vlaneseq
    %v564 = vshrl.u32 %v563, 7
    %v565 = vsub.s32 2, %v564
    %v566 = vrot.slane %v553, %v565
    %v567 = vlaneseq
    %v568 = vshrl.u32 %v567, 7
    %v569 = vsub.s32 3, %v568
    %v570 = vrot.slane %v553, %v569
    %v571 = vlaneseq
    %v572 = vshrl.u32 %v571, 7
    %v573 = vsub.s32 4, %v572
    %v574 = vrot.slane %v553, %v573
    %v575 = vlaneseq
    %v576 = vshrl.u32 %v575, 7
    %v577 = vsub.s32 5, %v576
    %v578 = vrot.slane %v553, %v577
    %v579 = vlaneseq
    %v580 = vshrl.u32 %v579, 7
    %v581 = vsub.s32 6, %v580
    %v582 = vrot.slane %v553, %v581
    %v583 = vlaneseq
    %v584 = vshrl.u32 %v583, 7
    %v585 = vsub.s32 7, %v584
    %v586 = vrot.slane %v553, %v585
    %v595 = vmul.f32 %v463, %v558
    %v596 = vmul.f32 %v465, %v562
    %v597 = vmul.f32 %v467, %v566
    %v598 = vmul.f32 %v469, %v570
    %v599 = vmul.f32 %v471, %v574
    %v600 = vmul.f32 %v473, %v578
    %v601 = vmul.f32 %v475, %v582
    %v602 = vmul.f32 %v477, %v586
    %v603 = vpack.c.bf16 %v595, %v595
    %v604 = vpack.c.bf16 %v596, %v596
    %v605 = vpack.c.bf16 %v597, %v597
    %v606 = vpack.c.bf16 %v598, %v598
    %v607 = vpack.c.bf16 %v599, %v599
    %v608 = vpack.c.bf16 %v600, %v600
    %v609 = vpack.c.bf16 %v601, %v601
    %v610 = vpack.c.bf16 %v602, %v602
    %612 = vset.pattern.permute.xlu0 0
    %613 = vperm.xlu0 %612, %v603
    %v614 = vpop.permute.xlu0 %613
    %617 = vset.pattern.permute.xlu0 0
    %618 = vperm.xlu0 %617, %v604
    %v619 = vpop.permute.xlu0 %618
    %622 = vset.pattern.permute.xlu0 0
    %623 = vperm.xlu0 %622, %v605
    %v624 = vpop.permute.xlu0 %623
    %627 = vset.pattern.permute.xlu0 0
    %628 = vperm.xlu0 %627, %v606
    %v629 = vpop.permute.xlu0 %628
    %632 = vset.pattern.permute.xlu0 0
    %633 = vperm.xlu0 %632, %v607
    %v634 = vpop.permute.xlu0 %633
    %637 = vset.pattern.permute.xlu0 0
    %638 = vperm.xlu0 %637, %v608
    %v639 = vpop.permute.xlu0 %638
    %642 = vset.pattern.permute.xlu0 0
    %643 = vperm.xlu0 %642, %v609
    %v644 = vpop.permute.xlu0 %643
    %647 = vset.pattern.permute.xlu0 0
    %648 = vperm.xlu0 %647, %v610
    %v649 = vpop.permute.xlu0 %648
    %v651 = vmul.bf16 %v614, %v103
    %v652 = vmul.bf16 %v619, %v104
    %v653 = vmul.bf16 %v624, %v105
    %v654 = vmul.bf16 %v629, %v106
    %v655 = vmul.bf16 %v634, %v107
    %v656 = vmul.bf16 %v639, %v108
    %v657 = vmul.bf16 %v644, %v109
    %v658 = vmul.bf16 %v649, %v110
    %v659 = vunpack.c.l.bf16 %v651
    %v660 = vunpack.c.l.bf16 %v652
    %v661 = vunpack.c.l.bf16 %v653
    %v662 = vunpack.c.l.bf16 %v654
    %v663 = vunpack.c.l.bf16 %v655
    %v664 = vunpack.c.l.bf16 %v656
    %v665 = vunpack.c.l.bf16 %v657
    %v666 = vunpack.c.l.bf16 %v658
    %v667 = vrot.slane %v659, 4
    %v668 = vadd.f32 %v659, %v667
    %v669 = vrot.slane %v668, 2
    %v670 = vadd.f32 %v668, %v669
    %v671 = vrot.slane %v670, 1
    %v672 = vadd.f32 %v670, %v671
    %v673 = vrot.slane %v660, 4
    %v674 = vadd.f32 %v660, %v673
    %v675 = vrot.slane %v674, 2
    %v676 = vadd.f32 %v674, %v675
    %v677 = vrot.slane %v676, 1
    %v678 = vadd.f32 %v676, %v677
    %v679 = vrot.slane %v661, 4
    %v680 = vadd.f32 %v661, %v679
    %v681 = vrot.slane %v680, 2
    %v682 = vadd.f32 %v680, %v681
    %v683 = vrot.slane %v682, 1
    %v684 = vadd.f32 %v682, %v683
    %v685 = vrot.slane %v662, 4
    %v686 = vadd.f32 %v662, %v685
    %v687 = vrot.slane %v686, 2
    %v688 = vadd.f32 %v686, %v687
    %v689 = vrot.slane %v688, 1
    %v690 = vadd.f32 %v688, %v689
    %v691 = vrot.slane %v663, 4
    %v692 = vadd.f32 %v663, %v691
    %v693 = vrot.slane %v692, 2
    %v694 = vadd.f32 %v692, %v693
    %v695 = vrot.slane %v694, 1
    %v696 = vadd.f32 %v694, %v695
    %v697 = vrot.slane %v664, 4
    %v698 = vadd.f32 %v664, %v697
    %v699 = vrot.slane %v698, 2
    %v700 = vadd.f32 %v698, %v699
    %v701 = vrot.slane %v700, 1
    %v702 = vadd.f32 %v700, %v701
    %v703 = vrot.slane %v665, 4
    %v704 = vadd.f32 %v665, %v703
    %v705 = vrot.slane %v704, 2
    %v706 = vadd.f32 %v704, %v705
    %v707 = vrot.slane %v706, 1
    %v708 = vadd.f32 %v706, %v707
    %v709 = vrot.slane %v666, 4
    %v710 = vadd.f32 %v666, %v709
    %v711 = vrot.slane %v710, 2
    %v712 = vadd.f32 %v710, %v711
    %v713 = vrot.slane %v712, 1
    %v714 = vadd.f32 %v712, %v713
    %v715 = vpack.c.bf16 %v672, %v672
    %v716 = vpack.c.bf16 %v678, %v678
    %v717 = vpack.c.bf16 %v684, %v684
    %v718 = vpack.c.bf16 %v690, %v690
    %v719 = vpack.c.bf16 %v696, %v696
    %v720 = vpack.c.bf16 %v702, %v702
    %v721 = vpack.c.bf16 %v708, %v708
    %v722 = vpack.c.bf16 %v714, %v714
    %v723 = vld [vmem:[#allocation7] sm:$0xf]
    %v724 = vld [vmem:[#allocation7 + $0x4] sm:$0xf]
    %v725 = vld [vmem:[#allocation7 + $0x8] sm:$0xf]
    %v726 = vld [vmem:[#allocation7 + $0xc] sm:$0xf]
    %v727 = vld [vmem:[#allocation7 + $0x10] sm:$0xf]
    %v728 = vld [vmem:[#allocation7 + $0x14] sm:$0xf]
    %v729 = vld [vmem:[#allocation7 + $0x18] sm:$0xf]
    %v730 = vld [vmem:[#allocation7 + $0x1c] sm:$0xf]
    %v731 = vld [vmem:[#allocation7 + $0x20] sm:$0xf]
    %v732 = vld [vmem:[#allocation7 + $0x24] sm:$0xf]
    %v733 = vld [vmem:[#allocation7 + $0x28] sm:$0xf]
    %v734 = vld [vmem:[#allocation7 + $0x2c] sm:$0xf]
    %v735 = vld [vmem:[#allocation7 + $0x30] sm:$0xf]
    %v736 = vld [vmem:[#allocation7 + $0x34] sm:$0xf]
    %v737 = vld [vmem:[#allocation7 + $0x38] sm:$0xf]
    %v738 = vld [vmem:[#allocation7 + $0x3c] sm:$0xf]
    %v739 = vlaneseq
    %v740 = vshrl.u32 %v739, 7
    %v741 = vsub.s32 0, %v740
    %v742 = vrot.slane %v114, %v741
    %v751 = vunpack.c.l.b16 %v715
    %v752 = vunpack.c.l.b16 %v716
    %v753 = vunpack.c.l.b16 %v717
    %v754 = vunpack.c.l.b16 %v718
    %v755 = vunpack.c.l.b16 %v719
    %v756 = vunpack.c.l.b16 %v720
    %v757 = vunpack.c.l.b16 %v721
    %v758 = vunpack.c.l.b16 %v722
    %v759 = vsel %vm394, %v752, %v751
    %v760 = vsel %vm396, %v753, %v759
    %v761 = vsel %vm398, %v754, %v760
    %v762 = vsel %vm400, %v755, %v761
    %v763 = vsel %vm402, %v756, %v762
    %v764 = vsel %vm404, %v757, %v763
    %v765 = vsel %vm406, %v758, %v764
    %v766 = vpack.c.b16 %v765, %v765
    %v784 = vunpack.c.l.b16 %v723
    %v785 = vunpack.c.l.b16 %v724
    %v786 = vunpack.c.l.b16 %v725
    %v787 = vunpack.c.l.b16 %v726
    %v788 = vunpack.c.l.b16 %v727
    %v789 = vunpack.c.l.b16 %v728
    %v790 = vunpack.c.l.b16 %v729
    %v791 = vunpack.c.l.b16 %v730
    %v792 = vunpack.c.l.b16 %v731
    %v793 = vunpack.c.l.b16 %v732
    %v794 = vunpack.c.l.b16 %v733
    %v795 = vunpack.c.l.b16 %v734
    %v796 = vunpack.c.l.b16 %v735
    %v797 = vunpack.c.l.b16 %v736
    %v798 = vunpack.c.l.b16 %v737
    %v799 = vunpack.c.l.b16 %v738
    %v800 = vpack.c.b16 %v785, %v784
    %v801 = vpack.c.b16 %v787, %v786
    %v802 = vpack.c.b16 %v789, %v788
    %v803 = vpack.c.b16 %v791, %v790
    %v804 = vpack.c.b16 %v793, %v792
    %v805 = vpack.c.b16 %v795, %v794
    %v806 = vpack.c.b16 %v797, %v796
    %v807 = vpack.c.b16 %v799, %v798
    %816 = vmatprep.subr.bf16.mxu0 0
    %817 = vmatpush1.bf16.msra.mxu0 %v800
    %818 = vmatprep.subr.bf16.mxu0 0
    %819 = vmatpush1.bf16.msra.mxu0 %v801
    %820 = vmatprep.subr.bf16.mxu0 0
    %821 = vmatpush1.bf16.msra.mxu0 %v802
    %822 = vmatprep.subr.bf16.mxu0 0
    %823 = vmatpush1.bf16.msra.mxu0 %v803
    %824 = vmatprep.subr.bf16.mxu0 0
    %825 = vmatpush1.bf16.msra.mxu0 %v804
    %826 = vmatprep.subr.bf16.mxu0 0
    %827 = vmatpush1.bf16.msra.mxu0 %v805
    %828 = vmatprep.subr.bf16.mxu0 0
    %829 = vmatpush1.bf16.msra.mxu0 %v806
    %830 = vmatprep.subr.bf16.mxu0 0
    %831 = vmatpush1.bf16.msra.mxu0 %v807
    %832 = vmatprep.subr.bf16.mxu0 0
    %833 = vmatpush1.bf16.msra.mxu0 0
    %834 = vmatprep.subr.bf16.mxu0 0
    %835 = vmatpush1.bf16.msra.mxu0 0
    %836 = vmatprep.subr.bf16.mxu0 0
    %837 = vmatpush1.bf16.msra.mxu0 0
    %838 = vmatprep.subr.bf16.mxu0 0
    %839 = vmatpush1.bf16.msra.mxu0 0
    %840 = vmatprep.subr.bf16.mxu0 0
    %841 = vmatpush1.bf16.msra.mxu0 0
    %842 = vmatprep.subr.bf16.mxu0 0
    %843 = vmatpush1.bf16.msra.mxu0 0
    %844 = vmatprep.subr.bf16.mxu0 0
    %845 = vmatpush1.bf16.msra.mxu0 0
    %846 = vmatprep.subr.bf16.mxu0 0
    %847 = vmatpush1.bf16.msra.mxu0 0
    %848 = vmatprep.mubr.bf16.mxu0 0
    %849 = vmatmul.mubr.bf16.gmra.mrb[0].mxu0 %v766
    %v850 = vpop.f32.mrb[0].mxu0
    %v851 = vadd.f32 %v742, %v850
    %v852 = vpop.f32.mrb[0].mxu0
    %v853 = vpop.f32.mrb[0].mxu0
    %v854 = vpop.f32.mrb[0].mxu0
    %855 = vdwg.mxu0
    %vm856 = vcmp.ge.f32.partialorder %v851, 0.0
    %s858 = vtos %v115
    %v859 = vstv %s858
    %v861 = vmul.f32 %v859, %v851
    %v862 = vsel %vm856, %v851, %v861
    %v863 = vpack.c.bf16 %v862, %v862
    %v864 = vld [vmem:[#allocation8] sm:$0xf]
    %v865 = vld [vmem:[#allocation8 + $0x4] sm:$0xf]
    %v866 = vld [vmem:[#allocation8 + $0x8] sm:$0xf]
    %v867 = vld [vmem:[#allocation8 + $0xc] sm:$0xf]
    %v868 = vld [vmem:[#allocation8 + $0x10] sm:$0xf]
    %v869 = vld [vmem:[#allocation8 + $0x14] sm:$0xf]
    %v870 = vld [vmem:[#allocation8 + $0x18] sm:$0xf]
    %v871 = vld [vmem:[#allocation8 + $0x1c] sm:$0xf]
    %v872 = vld [vmem:[#allocation8 + $0x20] sm:$0xf]
    %v873 = vld [vmem:[#allocation8 + $0x24] sm:$0xf]
    %v874 = vld [vmem:[#allocation8 + $0x28] sm:$0xf]
    %v875 = vld [vmem:[#allocation8 + $0x2c] sm:$0xf]
    %v876 = vld [vmem:[#allocation8 + $0x30] sm:$0xf]
    %v877 = vld [vmem:[#allocation8 + $0x34] sm:$0xf]
    %v878 = vld [vmem:[#allocation8 + $0x38] sm:$0xf]
    %v879 = vld [vmem:[#allocation8 + $0x3c] sm:$0xf]
    %v880 = vld [vmem:[#allocation11] sm:$0x1]
    %v882 = vlaneseq
    %v883 = vshrl.u32 %v882, 7
    %v884 = vsub.s32 0, %v883
    %v885 = vrot.slane %v880, %v884
    %v903 = vunpack.c.l.b16 %v864
    %v904 = vunpack.c.l.b16 %v865
    %v905 = vunpack.c.l.b16 %v866
    %v906 = vunpack.c.l.b16 %v867
    %v907 = vunpack.c.l.b16 %v868
    %v908 = vunpack.c.l.b16 %v869
    %v909 = vunpack.c.l.b16 %v870
    %v910 = vunpack.c.l.b16 %v871
    %v911 = vunpack.c.l.b16 %v872
    %v912 = vunpack.c.l.b16 %v873
    %v913 = vunpack.c.l.b16 %v874
    %v914 = vunpack.c.l.b16 %v875
    %v915 = vunpack.c.l.b16 %v876
    %v916 = vunpack.c.l.b16 %v877
    %v917 = vunpack.c.l.b16 %v878
    %v918 = vunpack.c.l.b16 %v879
    %v919 = vpack.c.b16 %v904, %v903
    %v920 = vpack.c.b16 %v906, %v905
    %v921 = vpack.c.b16 %v908, %v907
    %v922 = vpack.c.b16 %v910, %v909
    %v923 = vpack.c.b16 %v912, %v911
    %v924 = vpack.c.b16 %v914, %v913
    %v925 = vpack.c.b16 %v916, %v915
    %v926 = vpack.c.b16 %v918, %v917
    %935 = vmatprep.subr.bf16.mxu0 0
    %936 = vmatpush1.bf16.msra.mxu0 %v919
    %937 = vmatprep.subr.bf16.mxu0 0
    %938 = vmatpush1.bf16.msra.mxu0 %v920
    %939 = vmatprep.subr.bf16.mxu0 0
    %940 = vmatpush1.bf16.msra.mxu0 %v921
    %941 = vmatprep.subr.bf16.mxu0 0
    %942 = vmatpush1.bf16.msra.mxu0 %v922
    %943 = vmatprep.subr.bf16.mxu0 0
    %944 = vmatpush1.bf16.msra.mxu0 %v923
    %945 = vmatprep.subr.bf16.mxu0 0
    %946 = vmatpush1.bf16.msra.mxu0 %v924
    %947 = vmatprep.subr.bf16.mxu0 0
    %948 = vmatpush1.bf16.msra.mxu0 %v925
    %949 = vmatprep.subr.bf16.mxu0 0
    %950 = vmatpush1.bf16.msra.mxu0 %v926
    %951 = vmatprep.subr.bf16.mxu0 0
    %952 = vmatpush1.bf16.msra.mxu0 0
    %953 = vmatprep.subr.bf16.mxu0 0
    %954 = vmatpush1.bf16.msra.mxu0 0
    %955 = vmatprep.subr.bf16.mxu0 0
    %956 = vmatpush1.bf16.msra.mxu0 0
    %957 = vmatprep.subr.bf16.mxu0 0
    %958 = vmatpush1.bf16.msra.mxu0 0
    %959 = vmatprep.subr.bf16.mxu0 0
    %960 = vmatpush1.bf16.msra.mxu0 0
    %961 = vmatprep.subr.bf16.mxu0 0
    %962 = vmatpush1.bf16.msra.mxu0 0
    %963 = vmatprep.subr.bf16.mxu0 0
    %964 = vmatpush1.bf16.msra.mxu0 0
    %965 = vmatprep.subr.bf16.mxu0 0
    %966 = vmatpush1.bf16.msra.mxu0 0
    %967 = vmatprep.mubr.bf16.mxu0 0
    %968 = vmatmul.mubr.bf16.gmra.mrb[0].mxu0 %v863
    %v969 = vpop.f32.mrb[0].mxu0
    %v970 = vadd.f32 %v885, %v969
    %v971 = vpop.f32.mrb[0].mxu0
    %v972 = vpop.f32.mrb[0].mxu0
    %v973 = vpop.f32.mrb[0].mxu0
    %974 = vdwg.mxu0
    %975 = vst [vmem:[#allocation13] sm:$0xff] %v970
    // Predicated region
    $region50: #{tpu_custom_call.1} parent=1 // pred_check
      _
    $region51: #{tpu_custom_call.1} parent=1 // pred_check_branch
      %977 = sbr.rel (0) target = $region53
    $region52: #{tpu_custom_call.1} parent=1 // pred_region
      %s979 = ssub.s32 128, 128
      %980 = vsyncadd [#allocation4], %s979
      %s982 = sshll.u32 [#allocation13], 4
      %s983 = int_to_ptr.vmem [resolvable:$true] %s982
      %985 = dma.vmem_to_hbm [thread:$0]  %s983, 128, %s6, [#allocation4]
    $region53: #{tpu_custom_call.1} parent=1 // pred_fallthru
      _
    // Predicated region
    $region54: #{tpu_custom_call.1} parent=1 // pred_check
      _
    $region55: #{tpu_custom_call.1} parent=1 // pred_check_branch
      %987 = sbr.rel (0) target = $region57
    $region56: #{tpu_custom_call.1} parent=1 // pred_region
      %988 = dma.done [#allocation4], 128
    $region57: #{tpu_custom_call.1} parent=1 // pred_fallthru
      _
    %989 = vsyncpa [#allocation3], 1
    %990 = vsyncpa [#allocation6], 1
    %991 = vsyncpa [#allocation9], 1
    %992 = vsyncpa [#allocation12], 1
    %993 = vsyncpa [#allocation4], 1

// kernel: tpu_custom_call.1
$region0: #{tpu_custom_call.1}
  #allocation0 [shape = 'u32[]', space=smem, size = 0x4, offset = 0x4, fixed_abs, tag = 'smem constant byte address 0x4 - core index']
  #allocation1 [shape = 'u32[144,128]{1,0:T(1,128)}', space=vmem, size = 0x12000, scoped, tag = 'internal scratch']
  %s0 = inlined_call_operand.hbm [shape: bf16[8,8,128], index: 0, kind: input, shape index: {}]
  %s1 = inlined_call_operand.hbm [shape: bf16[128,128], index: 1, kind: input, shape index: {}]
  %s2 = inlined_call_operand.hbm [shape: bf16[128,128], index: 2, kind: input, shape index: {}]
  %s3 = inlined_call_operand.hbm [shape: bf16[128,128], index: 3, kind: input, shape index: {}]
  %s4 = inlined_call_operand.hbm [shape: f32[4,128], index: 4, kind: input, shape index: {}]
  %s5 = inlined_call_operand.hbm [shape: f32[1,128], index: 5, kind: input, shape index: {}]
  %s6 = inlined_call_operand.hbm [shape: f32[8,128], index: 6, kind: output, shape index: {}]
  %s7 = sld [smem:[#allocation0]]
  $region58: #{tpu_custom_call.1} parent=0
    _
  %s9 = ssub.s32 1, %s7
  %s10 = scalar_select 0, %s9, %s7
  $region1: #{tpu_custom_call.1} parent=0
    #allocation2 [shape = 'u8[16384]{0}', space=vmem, size = 0x4000, scoped, tag = 'input window, operand 0, single buffered']
    #allocation3 [shape = 's32[1]{0}', space=sflag, size = 0x4, scoped, tag = 'scoped memory for tpu_custom_call.1']
    #allocation4 [shape = 's32[1]{0}', space=sflag, size = 0x4, scoped, tag = 'scoped memory for tpu_custom_call.1']
    #allocation5 [shape = 'u8[32768]{0}', space=vmem, size = 0x8000, scoped, tag = 'input window, operand 1, single buffered']
    #allocation6 [shape = 's32[1]{0}', space=sflag, size = 0x4, scoped, tag = 'scoped memory for tpu_custom_call.1']
    #allocation7 [shape = 'u8[32768]{0}', space=vmem, size = 0x8000, scoped, tag = 'input window, operand 2, single buffered']
    #allocation8 [shape = 'u8[32768]{0}', space=vmem, size = 0x8000, scoped, tag = 'input window, operand 3, single buffered']
    #allocation9 [shape = 's32[1]{0}', space=sflag, size = 0x4, scoped, tag = 'scoped memory for tpu_custom_call.1']
    #allocation10 [shape = 'u8[2048]{0}', space=vmem, size = 0x800, scoped, tag = 'input window, operand 4, single buffered']
    #allocation11 [shape = 'u8[512]{0}', space=vmem, size = 0x400, scoped, tag = 'input window, operand 5, single buffered']
    #allocation12 [shape = 's32[1]{0}', space=sflag, size = 0x4, scoped, tag = 'scoped memory for tpu_custom_call.1']
    #allocation13 [shape = 'u8[4096]{0}', space=vmem, size = 0x1000, scoped, tag = 'output window, operand 0, single buffered']
    %11 = vsyncpa [#allocation3], 0
    %12 = vsyncpa [#allocation6], 0
    %13 = vsyncpa [#allocation9], 0
    %14 = vsyncpa [#allocation12], 0
    %15 = vsyncpa [#allocation4], 0
    // Predicated region
    $region2: #{tpu_custom_call.1} parent=1 // pred_check
      _
    $region3: #{tpu_custom_call.1} parent=1 // pred_check_branch
      %17 = sbr.rel (0) target = $region5
    $region4: #{tpu_custom_call.1} parent=1 // pred_region
      %s19 = ssub.s32 512, 512
      %20 = vsyncadd [#allocation3], %s19
      %s21 = sshll.u32 [#allocation2], 4
      %s22 = int_to_ptr.vmem [resolvable:$true] %s21
      %27 = dma.hbm_to_vmem [thread:$0]  %s0, 512, %s22, [#allocation3], 64, 64, 4
    $region5: #{tpu_custom_call.1} parent=1 // pred_fallthru
      _
    // Predicated region
    $region6: #{tpu_custom_call.1} parent=1 // pred_check
      _
    $region7: #{tpu_custom_call.1} parent=1 // pred_check_branch
      %29 = sbr.rel (0) target = $region9
    $region8: #{tpu_custom_call.1} parent=1 // pred_region
      %s31 = ssub.s32 1024, 1024
      %32 = vsyncadd [#allocation6], %s31
      %s33 = sshll.u32 [#allocation5], 4
      %s34 = int_to_ptr.vmem [resolvable:$true] %s33
      %39 = dma.hbm_to_vmem [thread:$0]  %s1, 1024, %s34, [#allocation6], 64, 64, 4
    $region9: #{tpu_custom_call.1} parent=1 // pred_fallthru
      _
    // Predicated region
    $region10: #{tpu_custom_call.1} parent=1 // pred_check
      _
    $region11: #{tpu_custom_call.1} parent=1 // pred_check_branch
      %41 = sbr.rel (0) target = $region13
    $region12: #{tpu_custom_call.1} parent=1 // pred_region
      %s43 = ssub.s32 1024, 1024
      %44 = vsyncadd [#allocation6], %s43
      %s45 = sshll.u32 [#allocation7], 4
      %s46 = int_to_ptr.vmem [resolvable:$true] %s45
      %51 = dma.hbm_to_vmem [thread:$0]  %s2, 1024, %s46, [#allocation6], 64, 64, 4
    $region13: #{tpu_custom_call.1} parent=1 // pred_fallthru
      _
    // Predicated region
    $region14: #{tpu_custom_call.1} parent=1 // pred_check
      _
    $region15: #{tpu_custom_call.1} parent=1 // pred_check_branch
      %53 = sbr.rel (0) target = $region17
    $region16: #{tpu_custom_call.1} parent=1 // pred_region
      %s55 = ssub.s32 1024, 1024
      %56 = vsyncadd [#allocation9], %s55
      %s57 = sshll.u32 [#allocation8], 4
      %s58 = int_to_ptr.vmem [resolvable:$true] %s57
      %63 = dma.hbm_to_vmem [thread:$0]  %s3, 1024, %s58, [#allocation9], 64, 64, 4
    $region17: #{tpu_custom_call.1} parent=1 // pred_fallthru
      _
    // Predicated region
    $region18: #{tpu_custom_call.1} parent=1 // pred_check
      _
    $region19: #{tpu_custom_call.1} parent=1 // pred_check_branch
      %65 = sbr.rel (0) target = $region21
    $region20: #{tpu_custom_call.1} parent=1 // pred_region
      %s67 = ssub.s32 64, 64
      %68 = vsyncadd [#allocation9], %s67
      %s70 = sshll.u32 [#allocation10], 4
      %s71 = int_to_ptr.vmem [resolvable:$true] %s70
      %73 = dma.hbm_to_vmem [thread:$0]  %s4, 64, %s71, [#allocation9]
    $region21: #{tpu_custom_call.1} parent=1 // pred_fallthru
      _
    // Predicated region
    $region22: #{tpu_custom_call.1} parent=1 // pred_check
      _
    $region23: #{tpu_custom_call.1} parent=1 // pred_check_branch
      %75 = sbr.rel (0) target = $region25
    $region24: #{tpu_custom_call.1} parent=1 // pred_region
      %s77 = ssub.s32 16, 16
      %78 = vsyncadd [#allocation12], %s77
      %s80 = sshll.u32 [#allocation11], 4
      %s81 = int_to_ptr.vmem [resolvable:$true] %s80
      %83 = dma.hbm_to_vmem [thread:$0]  %s5, 16, %s81, [#allocation12]
    $region25: #{tpu_custom_call.1} parent=1 // pred_fallthru
      _
    // Predicated region
    $region26: #{tpu_custom_call.1} parent=1 // pred_check
      _
    $region27: #{tpu_custom_call.1} parent=1 // pred_check_branch
      %85 = sbr.rel (0) target = $region29
    $region28: #{tpu_custom_call.1} parent=1 // pred_region
      %86 = dma.done [#allocation3], 512
    $region29: #{tpu_custom_call.1} parent=1 // pred_fallthru
      _
    // Predicated region
    $region30: #{tpu_custom_call.1} parent=1 // pred_check
      _
    $region31: #{tpu_custom_call.1} parent=1 // pred_check_branch
      %88 = sbr.rel (0) target = $region33
    $region32: #{tpu_custom_call.1} parent=1 // pred_region
      %89 = dma.done [#allocation6], 1024
    $region33: #{tpu_custom_call.1} parent=1 // pred_fallthru
      _
    // Predicated region
    $region34: #{tpu_custom_call.1} parent=1 // pred_check
      _
    $region35: #{tpu_custom_call.1} parent=1 // pred_check_branch
      %91 = sbr.rel (0) target = $region37
    $region36: #{tpu_custom_call.1} parent=1 // pred_region
      %92 = dma.done [#allocation6], 1024
    $region37: #{tpu_custom_call.1} parent=1 // pred_fallthru
      _
    // Predicated region
    $region38: #{tpu_custom_call.1} parent=1 // pred_check
      _
    $region39: #{tpu_custom_call.1} parent=1 // pred_check_branch
      %94 = sbr.rel (0) target = $region41
    $region40: #{tpu_custom_call.1} parent=1 // pred_region
      %95 = dma.done [#allocation9], 1024
    $region41: #{tpu_custom_call.1} parent=1 // pred_fallthru
      _
    // Predicated region
    $region42: #{tpu_custom_call.1} parent=1 // pred_check
      _
    $region43: #{tpu_custom_call.1} parent=1 // pred_check_branch
      %97 = sbr.rel (0) target = $region45
    $region44: #{tpu_custom_call.1} parent=1 // pred_region
      %98 = dma.done [#allocation9], 64
    $region45: #{tpu_custom_call.1} parent=1 // pred_fallthru
      _
    // Predicated region
    $region46: #{tpu_custom_call.1} parent=1 // pred_check
      _
    $region47: #{tpu_custom_call.1} parent=1 // pred_check_branch
      %100 = sbr.rel (0) target = $region49
    $region48: #{tpu_custom_call.1} parent=1 // pred_region
      %101 = dma.done [#allocation12], 16
    $region49: #{tpu_custom_call.1} parent=1 // pred_fallthru
      _
    %v103 = vld [vmem:[#allocation2] sm:$0xf]
    %v104 = vld [vmem:[#allocation2 + $0x4] sm:$0xf]
    %v105 = vld [vmem:[#allocation2 + $0x8] sm:$0xf]
    %v106 = vld [vmem:[#allocation2 + $0xc] sm:$0xf]
    %v107 = vld [vmem:[#allocation2 + $0x10] sm:$0xf]
    %v108 = vld [vmem:[#allocation2 + $0x14] sm:$0xf]
    %v109 = vld [vmem:[#allocation2 + $0x18] sm:$0xf]
    %v110 = vld [vmem:[#allocation2 + $0x1c] sm:$0xf]
    %v111 = vld [vmem:[#allocation10] sm:$0x1]
    %v112 = vld [vmem:[#allocation10 + $0x1] sm:$0x1]
    %v113 = vpack.c.bf16 %v112, %v112
    %v114 = vld [vmem:[#allocation10 + $0x2] sm:$0x1]
    %v115 = vld [vmem:[#allocation10 + $0x3] sm:$0x1]
    %v116 = vld [vmem:[#allocation5] sm:$0xf]
    %v117 = vld [vmem:[#allocation5 + $0x4] sm:$0xf]
    %v118 = vld [vmem:[#allocation5 + $0x8] sm:$0xf]
    %v119 = vld [vmem:[#allocation5 + $0xc] sm:$0xf]
    %v120 = vld [vmem:[#allocation5 + $0x10] sm:$0xf]
    %v121 = vld [vmem:[#allocation5 + $0x14] sm:$0xf]
    %v122 = vld [vmem:[#allocation5 + $0x18] sm:$0xf]
    %v123 = vld [vmem:[#allocation5 + $0x1c] sm:$0xf]
    %v124 = vld [vmem:[#allocation5 + $0x20] sm:$0xf]
    %v125 = vld [vmem:[#allocation5 + $0x24] sm:$0xf]
    %v126 = vld [vmem:[#allocation5 + $0x28] sm:$0xf]
    %v127 = vld [vmem:[#allocation5 + $0x2c] sm:$0xf]
    %v128 = vld [vmem:[#allocation5 + $0x30] sm:$0xf]
    %v129 = vld [vmem:[#allocation5 + $0x34] sm:$0xf]
    %v130 = vld [vmem:[#allocation5 + $0x38] sm:$0xf]
    %v131 = vld [vmem:[#allocation5 + $0x3c] sm:$0xf]
    %v132 = vlaneseq
    %v133 = vshrl.u32 %v132, 7
    %v134 = vsub.s32 0, %v133
    %v135 = vrot.slane %v111, %v134
    %v144 = vunpack.c.l.b16 %v103
    %v145 = vunpack.c.l.b16 %v104
    %v146 = vunpack.c.l.b16 %v105
    %v147 = vunpack.c.l.b16 %v106
    %v148 = vunpack.c.l.b16 %v107
    %v149 = vunpack.c.l.b16 %v108
    %v150 = vunpack.c.l.b16 %v109
    %v151 = vunpack.c.l.b16 %v110
    %v152 = vpack.c.b16 %v145, %v144
    %v153 = vpack.c.b16 %v147, %v146
    %v154 = vpack.c.b16 %v149, %v148
    %v155 = vpack.c.b16 %v151, %v150
    %v176 = vunpack.c.l.b16 %v116
    %v177 = vunpack.c.l.b16 %v117
    %v178 = vunpack.c.l.b16 %v118
    %v179 = vunpack.c.l.b16 %v119
    %v180 = vunpack.c.l.b16 %v120
    %v181 = vunpack.c.l.b16 %v121
    %v182 = vunpack.c.l.b16 %v122
    %v183 = vunpack.c.l.b16 %v123
    %v184 = vunpack.c.l.b16 %v124
    %v185 = vunpack.c.l.b16 %v125
    %v186 = vunpack.c.l.b16 %v126
    %v187 = vunpack.c.l.b16 %v127
    %v188 = vunpack.c.l.b16 %v128
    %v189 = vunpack.c.l.b16 %v129
    %v190 = vunpack.c.l.b16 %v130
    %v191 = vunpack.c.l.b16 %v131
    %v192 = vpack.c.b16 %v177, %v176
    %v193 = vpack.c.b16 %v179, %v178
    %v194 = vpack.c.b16 %v181, %v180
    %v195 = vpack.c.b16 %v183, %v182
    %v196 = vpack.c.b16 %v185, %v184
    %v197 = vpack.c.b16 %v187, %v186
    %v198 = vpack.c.b16 %v189, %v188
    %v199 = vpack.c.b16 %v191, %v190
    %208 = vmatprep.subr.bf16.mxu0 0
    %209 = vmatpush1.bf16.msra.mxu0 %v192
    %210 = vmatprep.subr.bf16.mxu0 0
    %211 = vmatpush1.bf16.msra.mxu0 %v193
    %212 = vmatprep.subr.bf16.mxu0 0
    %213 = vmatpush1.bf16.msra.mxu0 %v194
    %214 = vmatprep.subr.bf16.mxu0 0
    %215 = vmatpush1.bf16.msra.mxu0 %v195
    %216 = vmatprep.subr.bf16.mxu0 0
    %217 = vmatpush1.bf16.msra.mxu0 %v196
    %218 = vmatprep.subr.bf16.mxu0 0
    %219 = vmatpush1.bf16.msra.mxu0 %v197
    %220 = vmatprep.subr.bf16.mxu0 0
    %221 = vmatpush1.bf16.msra.mxu0 %v198
    %222 = vmatprep.subr.bf16.mxu0 0
    %223 = vmatpush1.bf16.msra.mxu0 %v199
    %224 = vmatprep.subr.bf16.mxu0 0
    %225 = vmatpush1.bf16.msra.mxu0 0
    %226 = vmatprep.subr.bf16.mxu0 0
    %227 = vmatpush1.bf16.msra.mxu0 0
    %228 = vmatprep.subr.bf16.mxu0 0
    %229 = vmatpush1.bf16.msra.mxu0 0
    %230 = vmatprep.subr.bf16.mxu0 0
    %231 = vmatpush1.bf16.msra.mxu0 0
    %232 = vmatprep.subr.bf16.mxu0 0
    %233 = vmatpush1.bf16.msra.mxu0 0
    %234 = vmatprep.subr.bf16.mxu0 0
    %235 = vmatpush1.bf16.msra.mxu0 0
    %236 = vmatprep.subr.bf16.mxu0 0
    %237 = vmatpush1.bf16.msra.mxu0 0
    %238 = vmatprep.subr.bf16.mxu0 0
    %239 = vmatpush1.bf16.msra.mxu0 0
    %240 = vmatprep.mubr.bf16.mxu0 0
    %241 = vmatmul.mubr.bf16.gmra.mrb[0].mxu0 %v152
    %v242 = vpop.f32.mrb[0].mxu0
    %v243 = vadd.f32 %v135, %v242
    %v244 = vpop.f32.mrb[0].mxu0
    %v245 = vpop.f32.mrb[0].mxu0
    %v246 = vadd.f32 %v135, %v245
    %v247 = vpop.f32.mrb[0].mxu0
    %248 = vmatprep.mubr.bf16.mxu0 0
    %249 = vmatmul.mubr.bf16.gmra.mrb[0].mxu0 %v153
    %v250 = vpop.f32.mrb[0].mxu0
    %v251 = vadd.f32 %v135, %v250
    %v252 = vpop.f32.mrb[0].mxu0
    %v253 = vpop.f32.mrb[0].mxu0
    %v254 = vadd.f32 %v135, %v253
    %v255 = vpop.f32.mrb[0].mxu0
    %256 = vmatprep.mubr.bf16.mxu0 0
    %257 = vmatmul.mubr.bf16.gmra.mrb[0].mxu0 %v154
    %v258 = vpop.f32.mrb[0].mxu0
    %v259 = vadd.f32 %v135, %v258
    %v260 = vpop.f32.mrb[0].mxu0
    %v261 = vpop.f32.mrb[0].mxu0
    %v262 = vadd.f32 %v135, %v261
    %v263 = vpop.f32.mrb[0].mxu0
    %264 = vmatprep.mubr.bf16.mxu0 0
    %265 = vmatmul.mubr.bf16.gmra.mrb[0].mxu0 %v155
    %v266 = vpop.f32.mrb[0].mxu0
    %v267 = vadd.f32 %v135, %v266
    %v268 = vpop.f32.mrb[0].mxu0
    %v269 = vpop.f32.mrb[0].mxu0
    %v270 = vadd.f32 %v135, %v269
    %v271 = vpop.f32.mrb[0].mxu0
    %272 = vdwg.mxu0
    %v273 = vtanh.pop %v243
    %v274 = vtanh.pop %v246
    %v275 = vtanh.pop %v251
    %v276 = vtanh.pop %v254
    %v277 = vtanh.pop %v259
    %v278 = vtanh.pop %v262
    %v279 = vtanh.pop %v267
    %v280 = vtanh.pop %v270
    %v281 = vpack.c.bf16 %v274, %v273
    %v282 = vpack.c.bf16 %v276, %v275
    %v283 = vpack.c.bf16 %v278, %v277
    %v284 = vpack.c.bf16 %v280, %v279
    %v289 = vunpack.c.l.b16 %v281
    %v290 = vunpack.c.h.b16 %v281
    %v291 = vunpack.c.l.b16 %v282
    %v292 = vunpack.c.h.b16 %v282
    %v293 = vunpack.c.l.b16 %v283
    %v294 = vunpack.c.h.b16 %v283
    %v295 = vunpack.c.l.b16 %v284
    %v296 = vunpack.c.h.b16 %v284
    %v297 = vpack.c.b16 %v289, %v289
    %v298 = vpack.c.b16 %v290, %v290
    %v299 = vpack.c.b16 %v291, %v291
    %v300 = vpack.c.b16 %v292, %v292
    %v301 = vpack.c.b16 %v293, %v293
    %v302 = vpack.c.b16 %v294, %v294
    %v303 = vpack.c.b16 %v295, %v295
    %v304 = vpack.c.b16 %v296, %v296
    %v314 = vpack.i.b16 %v113, %v113
    %v316 = vlaneseq
    %v317 = vshrl.u32 %v316, 7
    %v318 = vsub.s32 0, %v317
    %v319 = vrot.slane %v314, %v318
    %v320 = vmul.bf16 %v297, %v319
    %v321 = vmul.bf16 %v298, %v319
    %v322 = vmul.bf16 %v299, %v319
    %v323 = vmul.bf16 %v300, %v319
    %v324 = vmul.bf16 %v301, %v319
    %v325 = vmul.bf16 %v302, %v319
    %v326 = vmul.bf16 %v303, %v319
    %v327 = vmul.bf16 %v304, %v319
    %v328 = vunpack.c.l.bf16 %v320
    %v329 = vunpack.c.l.bf16 %v321
    %v330 = vunpack.c.l.bf16 %v322
    %v331 = vunpack.c.l.bf16 %v323
    %v332 = vunpack.c.l.bf16 %v324
    %v333 = vunpack.c.l.bf16 %v325
    %v334 = vunpack.c.l.bf16 %v326
    %v335 = vunpack.c.l.bf16 %v327
    %336 = vadd.xlane.f32.xlu0 %v328
    %v337 = vpop.xlane.xlu0 %336
    %338 = vadd.xlane.f32.xlu0 %v329
    %v339 = vpop.xlane.xlu0 %338
    %340 = vadd.xlane.f32.xlu0 %v330
    %v341 = vpop.xlane.xlu0 %340
    %342 = vadd.xlane.f32.xlu0 %v331
    %v343 = vpop.xlane.xlu0 %342
    %344 = vadd.xlane.f32.xlu0 %v332
    %v345 = vpop.xlane.xlu0 %344
    %346 = vadd.xlane.f32.xlu0 %v333
    %v347 = vpop.xlane.xlu0 %346
    %348 = vadd.xlane.f32.xlu0 %v334
    %v349 = vpop.xlane.xlu0 %348
    %350 = vadd.xlane.f32.xlu0 %v335
    %v351 = vpop.xlane.xlu0 %350
    %v360 = vlaneseq
    %v361 = vand.u32 %v360, 127
    %v362 = vlaneseq
    %v363 = vshrl.u32 %v362, 7
    %v364 = vsub.s32 %v361, %v363
    %v365 = vrot.slane %v337, %v364
    %v366 = vlaneseq
    %v367 = vshrl.u32 %v366, 7
    %v368 = vsub.s32 %v361, %v367
    %v369 = vrot.slane %v339, %v368
    %v370 = vlaneseq
    %v371 = vshrl.u32 %v370, 7
    %v372 = vsub.s32 %v361, %v371
    %v373 = vrot.slane %v341, %v372
    %v374 = vlaneseq
    %v375 = vshrl.u32 %v374, 7
    %v376 = vsub.s32 %v361, %v375
    %v377 = vrot.slane %v343, %v376
    %v378 = vlaneseq
    %v379 = vshrl.u32 %v378, 7
    %v380 = vsub.s32 %v361, %v379
    %v381 = vrot.slane %v345, %v380
    %v382 = vlaneseq
    %v383 = vshrl.u32 %v382, 7
    %v384 = vsub.s32 %v361, %v383
    %v385 = vrot.slane %v347, %v384
    %v386 = vlaneseq
    %v387 = vshrl.u32 %v386, 7
    %v388 = vsub.s32 %v361, %v387
    %v389 = vrot.slane %v349, %v388
    %v390 = vlaneseq
    %v391 = vshrl.u32 %v390, 7
    %v392 = vsub.s32 %v361, %v391
    %v393 = vrot.slane %v351, %v392
    %vm394 = vcmask 1041409
    %v395 = vsel %vm394, %v369, %v365
    %vm396 = vcmask 1042434
    %v397 = vsel %vm396, %v373, %v395
    %vm398 = vcmask 1043459
    %v399 = vsel %vm398, %v377, %v397
    %vm400 = vcmask 1044484
    %v401 = vsel %vm400, %v381, %v399
    %vm402 = vcmask 1045509
    %v403 = vsel %vm402, %v385, %v401
    %vm404 = vcmask 1046534
    %v405 = vsel %vm404, %v389, %v403
    %vm406 = vcmask 1047559
    %v407 = vsel %vm406, %v393, %v405
    %vm409 = vcmask 64512
    %v410 = vsel %vm409, %v407, -inf
    %411 = vmax.xlane.f32.xlu0 %v410
    %v412 = vpop.xlane.xlu0 %411
    %v414 = vlaneseq
    %v415 = vshrl.u32 %v414, 7
    %v416 = vsub.s32 0, %v415
    %v417 = vrot.slane %v412, %v416
    %v418 = vlaneseq
    %v419 = vshrl.u32 %v418, 7
    %v420 = vsub.s32 1, %v419
    %v421 = vrot.slane %v412, %v420
    %v422 = vlaneseq
    %v423 = vshrl.u32 %v422, 7
    %v424 = vsub.s32 2, %v423
    %v425 = vrot.slane %v412, %v424
    %v426 = vlaneseq
    %v427 = vshrl.u32 %v426, 7
    %v428 = vsub.s32 3, %v427
    %v429 = vrot.slane %v412, %v428
    %v430 = vlaneseq
    %v431 = vshrl.u32 %v430, 7
    %v432 = vsub.s32 4, %v431
    %v433 = vrot.slane %v412, %v432
    %v434 = vlaneseq
    %v435 = vshrl.u32 %v434, 7
    %v436 = vsub.s32 5, %v435
    %v437 = vrot.slane %v412, %v436
    %v438 = vlaneseq
    %v439 = vshrl.u32 %v438, 7
    %v440 = vsub.s32 6, %v439
    %v441 = vrot.slane %v412, %v440
    %v442 = vlaneseq
    %v443 = vshrl.u32 %v442, 7
    %v444 = vsub.s32 7, %v443
    %v445 = vrot.slane %v412, %v444
    %v454 = vsub.f32 %v337, %v417
    %v455 = vsub.f32 %v339, %v421
    %v456 = vsub.f32 %v341, %v425
    %v457 = vsub.f32 %v343, %v429
    %v458 = vsub.f32 %v345, %v433
    %v459 = vsub.f32 %v347, %v437
    %v460 = vsub.f32 %v349, %v441
    %v461 = vsub.f32 %v351, %v445
    %v462 = vmul.f32 %v454, 1.442695
    %v463 = vpow.pop %v462
    %v464 = vmul.f32 %v455, 1.442695
    %v465 = vpow.pop %v464
    %v466 = vmul.f32 %v456, 1.442695
    %v467 = vpow.pop %v466
    %v468 = vmul.f32 %v457, 1.442695
    %v469 = vpow.pop %v468
    %v470 = vmul.f32 %v458, 1.442695
    %v471 = vpow.pop %v470
    %v472 = vmul.f32 %v459, 1.442695
    %v473 = vpow.pop %v472
    %v474 = vmul.f32 %v460, 1.442695
    %v475 = vpow.pop %v474
    %v476 = vmul.f32 %v461, 1.442695
    %v477 = vpow.pop %v476
    %486 = vset.pattern.permute.xlu0 0
    %487 = vperm.xlu0 %486, %v463
    %v488 = vpop.permute.xlu0 %487
    %489 = vset.pattern.permute.xlu0 0
    %490 = vperm.xlu0 %489, %v465
    %v491 = vpop.permute.xlu0 %490
    %492 = vset.pattern.permute.xlu0 0
    %493 = vperm.xlu0 %492, %v467
    %v494 = vpop.permute.xlu0 %493
    %495 = vset.pattern.permute.xlu0 0
    %496 = vperm.xlu0 %495, %v469
    %v497 = vpop.permute.xlu0 %496
    %498 = vset.pattern.permute.xlu0 0
    %499 = vperm.xlu0 %498, %v471
    %v500 = vpop.permute.xlu0 %499
    %501 = vset.pattern.permute.xlu0 0
    %502 = vperm.xlu0 %501, %v473
    %v503 = vpop.permute.xlu0 %502
    %504 = vset.pattern.permute.xlu0 0
    %505 = vperm.xlu0 %504, %v475
    %v506 = vpop.permute.xlu0 %505
    %507 = vset.pattern.permute.xlu0 0
    %508 = vperm.xlu0 %507, %v477
    %v509 = vpop.permute.xlu0 %508
    %v510 = vlaneseq
    %v511 = vshrl.u32 %v510, 7
    %v512 = vsub.s32 %v361, %v511
    %v513 = vrot.slane %v488, %v512
    %v514 = vlaneseq
    %v515 = vshrl.u32 %v514, 7
    %v516 = vsub.s32 %v361, %v515
    %v517 = vrot.slane %v491, %v516
    %v518 = vlaneseq
    %v519 = vshrl.u32 %v518, 7
    %v520 = vsub.s32 %v361, %v519
    %v521 = vrot.slane %v494, %v520
    %v522 = vlaneseq
    %v523 = vshrl.u32 %v522, 7
    %v524 = vsub.s32 %v361, %v523
    %v525 = vrot.slane %v497, %v524
    %v526 = vlaneseq
    %v527 = vshrl.u32 %v526, 7
    %v528 = vsub.s32 %v361, %v527
    %v529 = vrot.slane %v500, %v528
    %v530 = vlaneseq
    %v531 = vshrl.u32 %v530, 7
    %v532 = vsub.s32 %v361, %v531
    %v533 = vrot.slane %v503, %v532
    %v534 = vlaneseq
    %v535 = vshrl.u32 %v534, 7
    %v536 = vsub.s32 %v361, %v535
    %v537 = vrot.slane %v506, %v536
    %v538 = vlaneseq
    %v539 = vshrl.u32 %v538, 7
    %v540 = vsub.s32 %v361, %v539
    %v541 = vrot.slane %v509, %v540
    %v542 = vsel %vm394, %v517, %v513
    %v543 = vsel %vm396, %v521, %v542
    %v544 = vsel %vm398, %v525, %v543
    %v545 = vsel %vm400, %v529, %v544
    %v546 = vsel %vm402, %v533, %v545
    %v547 = vsel %vm404, %v537, %v546
    %v548 = vsel %vm406, %v541, %v547
    %v550 = vsel %vm409, %v548, 0.0
    %551 = vadd.xlane.f32.xlu0 %v550
    %v552 = vpop.xlane.xlu0 %551
    %v553 = vrcp.pop %v552
    %v555 = vlaneseq
    %v556 = vshrl.u32 %v555, 7
    %v557 = vsub.s32 0, %v556
    %v558 = vrot.slane %v553, %v557
    %v559 = vlaneseq
    %v560 = vshrl.u32 %v559, 7
    %v561 = vsub.s32 1, %v560
    %v562 = vrot.slane %v553, %v561
    %v563 = vlaneseq
    %v564 = vshrl.u32 %v563, 7
    %v565 = vsub.s32 2, %v564
    %v566 = vrot.slane %v553, %v565
    %v567 = vlaneseq
    %v568 = vshrl.u32 %v567, 7
    %v569 = vsub.s32 3, %v568
    %v570 = vrot.slane %v553, %v569
    %v571 = vlaneseq
    %v572 = vshrl.u32 %v571, 7
    %v573 = vsub.s32 4, %v572
    %v574 = vrot.slane %v553, %v573
    %v575 = vlaneseq
    %v576 = vshrl.u32 %v575, 7
    %v577 = vsub.s32 5, %v576
    %v578 = vrot.slane %v553, %v577
    %v579 = vlaneseq
    %v580 = vshrl.u32 %v579, 7
    %v581 = vsub.s32 6, %v580
    %v582 = vrot.slane %v553, %v581
    %v583 = vlaneseq
    %v584 = vshrl.u32 %v583, 7
    %v585 = vsub.s32 7, %v584
    %v586 = vrot.slane %v553, %v585
    %v595 = vmul.f32 %v463, %v558
    %v596 = vmul.f32 %v465, %v562
    %v597 = vmul.f32 %v467, %v566
    %v598 = vmul.f32 %v469, %v570
    %v599 = vmul.f32 %v471, %v574
    %v600 = vmul.f32 %v473, %v578
    %v601 = vmul.f32 %v475, %v582
    %v602 = vmul.f32 %v477, %v586
    %v603 = vpack.c.bf16 %v595, %v595
    %v604 = vpack.c.bf16 %v596, %v596
    %v605 = vpack.c.bf16 %v597, %v597
    %v606 = vpack.c.bf16 %v598, %v598
    %v607 = vpack.c.bf16 %v599, %v599
    %v608 = vpack.c.bf16 %v600, %v600
    %v609 = vpack.c.bf16 %v601, %v601
    %v610 = vpack.c.bf16 %v602, %v602
    %612 = vset.pattern.permute.xlu0 0
    %613 = vperm.xlu0 %612, %v603
    %v614 = vpop.permute.xlu0 %613
    %617 = vset.pattern.permute.xlu0 0
    %618 = vperm.xlu0 %617, %v604
    %v619 = vpop.permute.xlu0 %618
    %622 = vset.pattern.permute.xlu0 0
    %623 = vperm.xlu0 %622, %v605
    %v624 = vpop.permute.xlu0 %623
    %627 = vset.pattern.permute.xlu0 0
    %628 = vperm.xlu0 %627, %v606
    %v629 = vpop.permute.xlu0 %628
    %632 = vset.pattern.permute.xlu0 0
    %633 = vperm.xlu0 %632, %v607
    %v634 = vpop.permute.xlu0 %633
    %637 = vset.pattern.permute.xlu0 0
    %638 = vperm.xlu0 %637, %v608
    %v639 = vpop.permute.xlu0 %638
    %642 = vset.pattern.permute.xlu0 0
    %643 = vperm.xlu0 %642, %v609
    %v644 = vpop.permute.xlu0 %643
    %647 = vset.pattern.permute.xlu0 0
    %648 = vperm.xlu0 %647, %v610
    %v649 = vpop.permute.xlu0 %648
    %v651 = vmul.bf16 %v614, %v103
    %v652 = vmul.bf16 %v619, %v104
    %v653 = vmul.bf16 %v624, %v105
    %v654 = vmul.bf16 %v629, %v106
    %v655 = vmul.bf16 %v634, %v107
    %v656 = vmul.bf16 %v639, %v108
    %v657 = vmul.bf16 %v644, %v109
    %v658 = vmul.bf16 %v649, %v110
    %v659 = vunpack.c.l.bf16 %v651
    %v660 = vunpack.c.l.bf16 %v652
    %v661 = vunpack.c.l.bf16 %v653
    %v662 = vunpack.c.l.bf16 %v654
    %v663 = vunpack.c.l.bf16 %v655
    %v664 = vunpack.c.l.bf16 %v656
    %v665 = vunpack.c.l.bf16 %v657
    %v666 = vunpack.c.l.bf16 %v658
    %v667 = vrot.slane %v659, 4
    %v668 = vadd.f32 %v659, %v667
    %v669 = vrot.slane %v668, 2
    %v670 = vadd.f32 %v668, %v669
    %v671 = vrot.slane %v670, 1
    %v672 = vadd.f32 %v670, %v671
    %v673 = vrot.slane %v660, 4
    %v674 = vadd.f32 %v660, %v673
    %v675 = vrot.slane %v674, 2
    %v676 = vadd.f32 %v674, %v675
    %v677 = vrot.slane %v676, 1
    %v678 = vadd.f32 %v676, %v677
    %v679 = vrot.slane %v661, 4
    %v680 = vadd.f32 %v661, %v679
    %v681 = vrot.slane %v680, 2
    %v682 = vadd.f32 %v680, %v681
    %v683 = vrot.slane %v682, 1
    %v684 = vadd.f32 %v682, %v683
    %v685 = vrot.slane %v662, 4
    %v686 = vadd.f32 %v662, %v685
    %v687 = vrot.slane %v686, 2
    %v688 = vadd.f32 %v686, %v687
    %v689 = vrot.slane %v688, 1
    %v690 = vadd.f32 %v688, %v689
    %v691 = vrot.slane %v663, 4
    %v692 = vadd.f32 %v663, %v691
    %v693 = vrot.slane %v692, 2
    %v694 = vadd.f32 %v692, %v693
    %v695 = vrot.slane %v694, 1
    %v696 = vadd.f32 %v694, %v695
    %v697 = vrot.slane %v664, 4
    %v698 = vadd.f32 %v664, %v697
    %v699 = vrot.slane %v698, 2
    %v700 = vadd.f32 %v698, %v699
    %v701 = vrot.slane %v700, 1
    %v702 = vadd.f32 %v700, %v701
    %v703 = vrot.slane %v665, 4
    %v704 = vadd.f32 %v665, %v703
    %v705 = vrot.slane %v704, 2
    %v706 = vadd.f32 %v704, %v705
    %v707 = vrot.slane %v706, 1
    %v708 = vadd.f32 %v706, %v707
    %v709 = vrot.slane %v666, 4
    %v710 = vadd.f32 %v666, %v709
    %v711 = vrot.slane %v710, 2
    %v712 = vadd.f32 %v710, %v711
    %v713 = vrot.slane %v712, 1
    %v714 = vadd.f32 %v712, %v713
    %v715 = vpack.c.bf16 %v672, %v672
    %v716 = vpack.c.bf16 %v678, %v678
    %v717 = vpack.c.bf16 %v684, %v684
    %v718 = vpack.c.bf16 %v690, %v690
    %v719 = vpack.c.bf16 %v696, %v696
    %v720 = vpack.c.bf16 %v702, %v702
    %v721 = vpack.c.bf16 %v708, %v708
    %v722 = vpack.c.bf16 %v714, %v714
    %v723 = vld [vmem:[#allocation7] sm:$0xf]
    %v724 = vld [vmem:[#allocation7 + $0x4] sm:$0xf]
    %v725 = vld [vmem:[#allocation7 + $0x8] sm:$0xf]
    %v726 = vld [vmem:[#allocation7 + $0xc] sm:$0xf]
    %v727 = vld [vmem:[#allocation7 + $0x10] sm:$0xf]
    %v728 = vld [vmem:[#allocation7 + $0x14] sm:$0xf]
    %v729 = vld [vmem:[#allocation7 + $0x18] sm:$0xf]
    %v730 = vld [vmem:[#allocation7 + $0x1c] sm:$0xf]
    %v731 = vld [vmem:[#allocation7 + $0x20] sm:$0xf]
    %v732 = vld [vmem:[#allocation7 + $0x24] sm:$0xf]
    %v733 = vld [vmem:[#allocation7 + $0x28] sm:$0xf]
    %v734 = vld [vmem:[#allocation7 + $0x2c] sm:$0xf]
    %v735 = vld [vmem:[#allocation7 + $0x30] sm:$0xf]
    %v736 = vld [vmem:[#allocation7 + $0x34] sm:$0xf]
    %v737 = vld [vmem:[#allocation7 + $0x38] sm:$0xf]
    %v738 = vld [vmem:[#allocation7 + $0x3c] sm:$0xf]
    %v739 = vlaneseq
    %v740 = vshrl.u32 %v739, 7
    %v741 = vsub.s32 0, %v740
    %v742 = vrot.slane %v114, %v741
    %v751 = vunpack.c.l.b16 %v715
    %v752 = vunpack.c.l.b16 %v716
    %v753 = vunpack.c.l.b16 %v717
    %v754 = vunpack.c.l.b16 %v718
    %v755 = vunpack.c.l.b16 %v719
    %v756 = vunpack.c.l.b16 %v720
    %v757 = vunpack.c.l.b16 %v721
    %v758 = vunpack.c.l.b16 %v722
    %v759 = vsel %vm394, %v752, %v751
    %v760 = vsel %vm396, %v753, %v759
    %v761 = vsel %vm398, %v754, %v760
    %v762 = vsel %vm400, %v755, %v761
    %v763 = vsel %vm402, %v756, %v762
    %v764 = vsel %vm404, %v757, %v763
    %v765 = vsel %vm406, %v758, %v764
    %v766 = vpack.c.b16 %v765, %v765
    %v784 = vunpack.c.l.b16 %v723
    %v785 = vunpack.c.l.b16 %v724
    %v786 = vunpack.c.l.b16 %v725
    %v787 = vunpack.c.l.b16 %v726
    %v788 = vunpack.c.l.b16 %v727
    %v789 = vunpack.c.l.b16 %v728
    %v790 = vunpack.c.l.b16 %v729
    %v791 = vunpack.c.l.b16 %v730
    %v792 = vunpack.c.l.b16 %v731
    %v793 = vunpack.c.l.b16 %v732
    %v794 = vunpack.c.l.b16 %v733
    %v795 = vunpack.c.l.b16 %v734
    %v796 = vunpack.c.l.b16 %v735
    %v797 = vunpack.c.l.b16 %v736
    %v798 = vunpack.c.l.b16 %v737
    %v799 = vunpack.c.l.b16 %v738
    %v800 = vpack.c.b16 %v785, %v784
    %v801 = vpack.c.b16 %v787, %v786
    %v802 = vpack.c.b16 %v789, %v788
    %v803 = vpack.c.b16 %v791, %v790
    %v804 = vpack.c.b16 %v793, %v792
    %v805 = vpack.c.b16 %v795, %v794
    %v806 = vpack.c.b16 %v797, %v796
    %v807 = vpack.c.b16 %v799, %v798
    %816 = vmatprep.subr.bf16.mxu0 0
    %817 = vmatpush1.bf16.msra.mxu0 %v800
    %818 = vmatprep.subr.bf16.mxu0 0
    %819 = vmatpush1.bf16.msra.mxu0 %v801
    %820 = vmatprep.subr.bf16.mxu0 0
    %821 = vmatpush1.bf16.msra.mxu0 %v802
    %822 = vmatprep.subr.bf16.mxu0 0
    %823 = vmatpush1.bf16.msra.mxu0 %v803
    %824 = vmatprep.subr.bf16.mxu0 0
    %825 = vmatpush1.bf16.msra.mxu0 %v804
    %826 = vmatprep.subr.bf16.mxu0 0
    %827 = vmatpush1.bf16.msra.mxu0 %v805
    %828 = vmatprep.subr.bf16.mxu0 0
    %829 = vmatpush1.bf16.msra.mxu0 %v806
    %830 = vmatprep.subr.bf16.mxu0 0
    %831 = vmatpush1.bf16.msra.mxu0 %v807
    %832 = vmatprep.subr.bf16.mxu0 0
    %833 = vmatpush1.bf16.msra.mxu0 0
    %834 = vmatprep.subr.bf16.mxu0 0
    %835 = vmatpush1.bf16.msra.mxu0 0
    %836 = vmatprep.subr.bf16.mxu0 0
    %837 = vmatpush1.bf16.msra.mxu0 0
    %838 = vmatprep.subr.bf16.mxu0 0
    %839 = vmatpush1.bf16.msra.mxu0 0
    %840 = vmatprep.subr.bf16.mxu0 0
    %841 = vmatpush1.bf16.msra.mxu0 0
    %842 = vmatprep.subr.bf16.mxu0 0
    %843 = vmatpush1.bf16.msra.mxu0 0
    %844 = vmatprep.subr.bf16.mxu0 0
    %845 = vmatpush1.bf16.msra.mxu0 0
    %846 = vmatprep.subr.bf16.mxu0 0
    %847 = vmatpush1.bf16.msra.mxu0 0
    %848 = vmatprep.mubr.bf16.mxu0 0
    %849 = vmatmul.mubr.bf16.gmra.mrb[0].mxu0 %v766
    %v850 = vpop.f32.mrb[0].mxu0
    %v851 = vadd.f32 %v742, %v850
    %v852 = vpop.f32.mrb[0].mxu0
    %v853 = vpop.f32.mrb[0].mxu0
    %v854 = vpop.f32.mrb[0].mxu0
    %855 = vdwg.mxu0
    %vm856 = vcmp.ge.f32.partialorder %v851, 0.0
    %s858 = vtos %v115
    %v859 = vstv %s858
    %v861 = vmul.f32 %v859, %v851
    %v862 = vsel %vm856, %v851, %v861
    %v863 = vpack.c.bf16 %v862, %v862
    %v864 = vld [vmem:[#allocation8] sm:$0xf]
    %v865 = vld [vmem:[#allocation8 + $0x4] sm:$0xf]
    %v866 = vld [vmem:[#allocation8 + $0x8] sm:$0xf]
    %v867 = vld [vmem:[#allocation8 + $0xc] sm:$0xf]
    %v868 = vld [vmem:[#allocation8 + $0x10] sm:$0xf]
    %v869 = vld [vmem:[#allocation8 + $0x14] sm:$0xf]
    %v870 = vld [vmem:[#allocation8 + $0x18] sm:$0xf]
    %v871 = vld [vmem:[#allocation8 + $0x1c] sm:$0xf]
    %v872 = vld [vmem:[#allocation8 + $0x20] sm:$0xf]
    %v873 = vld [vmem:[#allocation8 + $0x24] sm:$0xf]
    %v874 = vld [vmem:[#allocation8 + $0x28] sm:$0xf]
    %v875 = vld [vmem:[#allocation8 + $0x2c] sm:$0xf]
    %v876 = vld [vmem:[#allocation8 + $0x30] sm:$0xf]
    %v877 = vld [vmem:[#allocation8 + $0x34] sm:$0xf]
    %v878 = vld [vmem:[#allocation8 + $0x38] sm:$0xf]
    %v879 = vld [vmem:[#allocation8 + $0x3c] sm:$0xf]
    %v880 = vld [vmem:[#allocation11] sm:$0x1]
    %v882 = vlaneseq
    %v883 = vshrl.u32 %v882, 7
    %v884 = vsub.s32 0, %v883
    %v885 = vrot.slane %v880, %v884
    %v903 = vunpack.c.l.b16 %v864
    %v904 = vunpack.c.l.b16 %v865
    %v905 = vunpack.c.l.b16 %v866
    %v906 = vunpack.c.l.b16 %v867
    %v907 = vunpack.c.l.b16 %v868
    %v908 = vunpack.c.l.b16 %v869
    %v909 = vunpack.c.l.b16 %v870
    %v910 = vunpack.c.l.b16 %v871
    %v911 = vunpack.c.l.b16 %v872
    %v912 = vunpack.c.l.b16 %v873
    %v913 = vunpack.c.l.b16 %v874
    %v914 = vunpack.c.l.b16 %v875
    %v915 = vunpack.c.l.b16 %v876
    %v916 = vunpack.c.l.b16 %v877
    %v917 = vunpack.c.l.b16 %v878
    %v918 = vunpack.c.l.b16 %v879
    %v919 = vpack.c.b16 %v904, %v903
    %v920 = vpack.c.b16 %v906, %v905
    %v921 = vpack.c.b16 %v908, %v907
    %v922 = vpack.c.b16 %v910, %v909
    %v923 = vpack.c.b16 %v912, %v911
    %v924 = vpack.c.b16 %v914, %v913
    %v925 = vpack.c.b16 %v916, %v915
    %v926 = vpack.c.b16 %v918, %v917
    %935 = vmatprep.subr.bf16.mxu0 0
    %936 = vmatpush1.bf16.msra.mxu0 %v919
    %937 = vmatprep.subr.bf16.mxu0 0
    %938 = vmatpush1.bf16.msra.mxu0 %v920
    %939 = vmatprep.subr.bf16.mxu0 0
    %940 = vmatpush1.bf16.msra.mxu0 %v921
    %941 = vmatprep.subr.bf16.mxu0 0
    %942 = vmatpush1.bf16.msra.mxu0 %v922
    %943 = vmatprep.subr.bf16.mxu0 0
    %944 = vmatpush1.bf16.msra.mxu0 %v923
    %945 = vmatprep.subr.bf16.mxu0 0
    %946 = vmatpush1.bf16.msra.mxu0 %v924
    %947 = vmatprep.subr.bf16.mxu0 0
    %948 = vmatpush1.bf16.msra.mxu0 %v925
    %949 = vmatprep.subr.bf16.mxu0 0
    %950 = vmatpush1.bf16.msra.mxu0 %v926
    %951 = vmatprep.subr.bf16.mxu0 0
    %952 = vmatpush1.bf16.msra.mxu0 0
    %953 = vmatprep.subr.bf16.mxu0 0
    %954 = vmatpush1.bf16.msra.mxu0 0
    %955 = vmatprep.subr.bf16.mxu0 0
    %956 = vmatpush1.bf16.msra.mxu0 0
    %957 = vmatprep.subr.bf16.mxu0 0
    %958 = vmatpush1.bf16.msra.mxu0 0
    %959 = vmatprep.subr.bf16.mxu0 0
    %960 = vmatpush1.bf16.msra.mxu0 0
    %961 = vmatprep.subr.bf16.mxu0 0
    %962 = vmatpush1.bf16.msra.mxu0 0
    %963 = vmatprep.subr.bf16.mxu0 0
    %964 = vmatpush1.bf16.msra.mxu0 0
    %965 = vmatprep.subr.bf16.mxu0 0
    %966 = vmatpush1.bf16.msra.mxu0 0
    %967 = vmatprep.mubr.bf16.mxu0 0
    %968 = vmatmul.mubr.bf16.gmra.mrb[0].mxu0 %v863
    %v969 = vpop.f32.mrb[0].mxu0
    %v970 = vadd.f32 %v885, %v969
    %v971 = vpop.f32.mrb[0].mxu0
    %v972 = vpop.f32.mrb[0].mxu0
    %v973 = vpop.f32.mrb[0].mxu0
    %974 = vdwg.mxu0
    %975 = vst [vmem:[#allocation13] sm:$0xff] %v970
    // Predicated region
    $region50: #{tpu_custom_call.1} parent=1 // pred_check
      _
    $region51: #{tpu_custom_call.1} parent=1 // pred_check_branch
      %977 = sbr.rel (0) target = $region53
    $region52: #{tpu_custom_call.1} parent=1 // pred_region
      %s979 = ssub.s32 128, 128
      %980 = vsyncadd [#allocation4], %s979
      %s982 = sshll.u32 [#allocation13], 4
      %s983 = int_to_ptr.vmem [resolvable:$true] %s982
      %985 = dma.vmem_to_hbm [thread:$0]  %s983, 128, %s6, [#allocation4]
    $region53: #{tpu_custom_call.1} parent=1 // pred_fallthru
      _
    // Predicated region
    $region54: #{tpu_custom_call.1} parent=1 // pred_check
      _
    $region55: #{tpu_custom_call.1} parent=1 // pred_check_branch
      %987 = sbr.rel (0) target = $region57
    $region56: #{tpu_custom_call.1} parent=1 // pred_region
      %988 = dma.done [#allocation4], 128
    $region57: #{tpu_custom_call.1} parent=1 // pred_fallthru
      _
    %989 = vsyncpa [#allocation3], 1
    %990 = vsyncpa [#allocation6], 1
    %991 = vsyncpa [#allocation9], 1
    %992 = vsyncpa [#allocation12], 1
    %993 = vsyncpa [#allocation4], 1

</llo_original>
